<compile_context>
chip_gen: v7x
topology: tpu7x:2x2x1
jax: 0.10.0
libtpu: 0.0.40
codegen_flags: <defaults>
</compile_context>

<pallas_src>
import functools

import jax
import jax.numpy as jnp
from jax.experimental import pallas as pl
from jax.experimental.pallas import tpu as pltpu


# ----------------------------------------------------------------------------
# Kernel
# ----------------------------------------------------------------------------
def _leaky(x, slope=0.1):
    # nn.LeakyReLU(0.1), computed in f32.
    return jnp.where(x > 0, x, slope * x)


def sparse_nn_kernel(
    # batch-tiled inputs
    x1_ref, x2_ref,
    # network1 layers 1-2 (lane-padded)
    w11_ref, b11_ref, w12_ref, b12_ref,
    # network2 layers 1-2 (layer-2 N lane-padded)
    w21_ref, b21_ref, w22_ref, b22_ref,
    # block-diagonal merge of net1-L3 (100->20) and net2-L3 (20->10)
    w3_ref, b3_ref,
    # head: fc1 (30->128 padded), fc2 (128 padded ->10)
    wf1_ref, bf1_ref, wf2_ref, bf2_ref,
    # fc_out stored as a (1,10) f32 row + (1,1) bias (VPU reduce, no MXU pass)
    wo_ref, bo_ref,
    # batch-tiled output
    out_ref,
    # VMEM scratch: (TILE_B, 256) bf16 concat buffer, fully rewritten each step
    cat_ref,
):
    f32, bf16 = jnp.float32, jnp.bfloat16

    def dense(x_bf16, w_ref, b_ref):
        # bf16 operands on the MXU, f32 accumulation, f32 bias add.
        return jnp.dot(x_bf16, w_ref[...], preferred_element_type=f32) + b_ref[...]

    # ---- network1 layers 1-2 ---------------------------------------------
    x1 = x1_ref[...].astype(bf16)                                   # (TB, 300)
    h0 = _leaky(dense(x1, w11_ref, b11_ref)).astype(bf16)           # (TB, 1024)
    h1 = _leaky(dense(h0, w12_ref, b12_ref)).astype(bf16)           # (TB, 128); 100..127 == 0

    # ---- network2 layers 1-2 ---------------------------------------------
    x2 = x2_ref[...].astype(bf16)                                   # (TB, 12)
    g1 = _leaky(dense(x2, w21_ref, b21_ref)).astype(bf16)           # (TB, 30)
    g2 = _leaky(dense(g1, w22_ref, b22_ref)).astype(bf16)           # (TB, 128); 20..127 == 0

    # ---- merged layer 3 (block-diagonal, one MXU pass instead of two) -----
    # cat = [h1 | g2] written at 128-aligned lane offsets; W3 = blockdiag(w13
    # at rows 0..99, w23 at rows 128..147), zero rows elsewhere -> exact.
    cat_ref[:, 0:128] = h1
    cat_ref[:, 128:256] = g2
    xcat = _leaky(dense(cat_ref[...], w3_ref, b3_ref)).astype(bf16)  # (TB, 30) = [x1o|x2o]

    # ---- head: fc1 / fc2 ---------------------------------------------------
    g = _leaky(dense(xcat, wf1_ref, bf1_ref)).astype(bf16)          # (TB, 128)
    h = _leaky(dense(g, wf2_ref, bf2_ref))                          # (TB, 10) f32

    # ---- fc_out as VPU multiply + lane reduce (saves an N=1 MXU pass) ------
    out_ref[...] = jnp.sum(h * wo_ref[...], axis=-1, keepdims=True) + bo_ref[...]


# ----------------------------------------------------------------------------
# Parameters (PyTorch-style init; weights bf16 except fc_out, biases f32)
# ----------------------------------------------------------------------------
def _linear_params(key, fan_in, fan_out, w_dtype=jnp.bfloat16):
    kw, kb = jax.random.split(key)
    bound = 1.0 / float(fan_in) ** 0.5
    w = jax.random.uniform(kw, (fan_in, fan_out), jnp.float32, -bound, bound)
    b = jax.random.uniform(kb, (1, fan_out), jnp.float32, -bound, bound)
    return w.astype(w_dtype), b


def init_sparse_nn_params(key):
    """Raw PyTorch-structured params (weights stored (in,out), bf16 quantized)."""
    keys = jax.random.split(key, 9)
    w11, b11 = _linear_params(keys[0], 300, 1000)
    w12, b12 = _linear_params(keys[1], 1000, 100)
    w13, b13 = _linear_params(keys[2], 100, 20)
    w21, b21 = _linear_params(keys[3], 12, 30)
    w22, b22 = _linear_params(keys[4], 30, 20)
    w23, b23 = _linear_params(keys[5], 20, 10)
    wf1, bf1 = _linear_params(keys[6], 30, 100)
    wf2, bf2 = _linear_params(keys[7], 100, 10)
    wo, bo = _linear_params(keys[8], 10, 1, w_dtype=jnp.float32)   # last layer pure f32
    return (w11, b11, w12, b12, w13, b13,
            w21, b21, w22, b22, w23, b23,
            wf1, bf1, wf2, bf2, wo, bo)


def pack_params(raw):
    """Kernel-side params: lane-padded widths, block-diag L3 merge, fc_out row."""
    (w11, b11, w12, b12, w13, b13,
     w21, b21, w22, b22, w23, b23,
     wf1, bf1, wf2, bf2, wo, bo) = raw
    bf16 = jnp.bfloat16

    def pad_w(w, k, n):
        return jnp.pad(w, ((0, k - w.shape[0]), (0, n - w.shape[1]))).astype(bf16)

    def pad_b(b, n):
        return jnp.pad(b, ((0, 0), (0, n - b.shape[1])))

    w11p, b11p = pad_w(w11, 300, 1024), pad_b(b11, 1024)    # N 1000 -> 1024
    w12p, b12p = pad_w(w12, 1024, 128), pad_b(b12, 128)     # K -> 1024, N 100 -> 128
    w22p, b22p = pad_w(w22, 30, 128), pad_b(b22, 128)       # N 20 -> 128
    # Block-diagonal merge of net1-L3 and net2-L3; second block starts at
    # K=128 so the in-kernel concat only needs lane-aligned stores.
    w3 = jnp.zeros((256, 30), bf16)
    w3 = w3.at[0:100, 0:20].set(w13.astype(bf16))
    w3 = w3.at[128:148, 20:30].set(w23.astype(bf16))
    b3 = jnp.concatenate([b13, b23], axis=1)                # (1, 30)
    wf1p, bf1p = pad_w(wf1, 30, 128), pad_b(bf1, 128)       # N 100 -> 128
    wf2p = pad_w(wf2, 128, 10)                              # K 100 -> 128
    wo_row = jnp.reshape(wo, (1, 10)).astype(jnp.float32)   # fc_out as lane reduce
    return (w11p, b11p, w12p, b12p,
            w21.astype(bf16), b21, w22p, b22p,
            w3, b3, wf1p, bf1p, wf2p, bf2, wo_row, bo)


# ----------------------------------------------------------------------------
# Wrapper: batch-tiled pallas_call
# ----------------------------------------------------------------------------
_LAYER_DIMS = ((300, 1024), (1024, 128), (12, 30), (30, 128),
               (256, 30), (30, 128), (128, 10), (10, 1))
_FLOPS_PER_ROW = 2 * sum(k * n for k, n in _LAYER_DIMS)


def _round_up(x, m):
    return (x + m - 1) // m * m


@functools.partial(jax.jit, static_argnames=("tile_b",))
def _sparse_nn_call(x1, x2, params, tile_b):
    padded_b = x1.shape[0]              # already a multiple of tile_b
    grid = (padded_b // tile_b,)

    def act_spec(nfeat):
        return pl.BlockSpec((tile_b, nfeat), lambda i: (i, 0))

    def const_spec(arr):
        # full-shape block, constant index -> stays VMEM-resident, no re-DMA
        return pl.BlockSpec(arr.shape, lambda i: (0, 0))

    in_specs = ([act_spec(x1.shape[1]), act_spec(x2.shape[1])]
                + [const_spec(p) for p in params])
    out_specs = pl.BlockSpec((tile_b, 1), lambda i: (i, 0))

    param_bytes = sum(int(p.size) * p.dtype.itemsize for p in params)
    cost = pl.CostEstimate(
        flops=int(_FLOPS_PER_ROW * padded_b),
        transcendentals=0,
        bytes_accessed=int(param_bytes + padded_b * (300 + 12 + 1) * 4),
    )

    # Scale the scoped-VMEM limit with the tile (~20 KiB of live intermediates
    # per row + weights/headroom): 48 MiB at TB=2048 (fits v7x's 64 MiB/TC);
    # bigger tiles on v6e/v5e (128 MiB physical) get a larger limit.
    vmem_limit = int(max(32 << 20, min(100 << 20, (8 << 20) + tile_b * 20 * 1024)))

    return pl.pallas_call(
        sparse_nn_kernel,
        out_shape=jax.ShapeDtypeStruct((padded_b, 1), jnp.float32),
        grid=grid,
        in_specs=in_specs,
        out_specs=out_specs,
        scratch_shapes=[pltpu.VMEM((tile_b, 256), jnp.bfloat16)],
        compiler_params=pltpu.CompilerParams(
            dimension_semantics=("parallel",),      # megacore sharding on v7x
            vmem_limit_bytes=vmem_limit,
        ),
        cost_estimate=cost,
    )(x1, x2, *params)


def sparse_nn_forward(x1, x2, kernel_params, tile_b=2048):
    """Forward pass. tile_b=2048 is safe on all gens; up to ~4096 on v6e/v5e
    (128 MiB VMEM), keep <=2048 on v7x (64 MiB per TensorCore)."""
    batch = x1.shape[0]
    tb = min(tile_b, _round_up(batch, 8))
    # Guarantee >=2 grid steps for non-trivial batches so ("parallel",) can
    # actually feed both v7x TensorCores (grid=(1,) would idle one TC).
    if batch > 8:
        tb = min(tb, _round_up((batch + 1) // 2, 8))
    padded_b = _round_up(batch, tb)
    if padded_b != batch:
        x1 = jnp.pad(x1, ((0, padded_b - batch), (0, 0)))
        x2 = jnp.pad(x2, ((0, padded_b - batch), (0, 0)))
    out = _sparse_nn_call(x1, x2, tuple(kernel_params), tb)
    return out[:batch]


# ----------------------------------------------------------------------------
# Pure-JAX reference: original SparseNN dataflow (same bf16 weights,
# f32 accumulation) to validate the padding / block-diag restructuring.
# ----------------------------------------------------------------------------
def _reference_forward(x1, x2, raw):
    (w11, b11, w12, b12, w13, b13,
     w21, b21, w22, b22, w23, b23,
     wf1, bf1, wf2, bf2, wo, bo) = raw

    def dense(x, w, b):
        return jnp.dot(x.astype(w.dtype), w, preferred_element_type=jnp.float32) + b

    a = _leaky(dense(x1, w11, b11))
    a = _leaky(dense(a, w12, b12))
    a = _leaky(dense(a, w13, b13))          # relu(network1(x1)) -> (B, 20)
    c = _leaky(dense(x2, w21, b21))
    c = _leaky(dense(c, w22, b22))
    c = _leaky(dense(c, w23, b23))          # relu(network2(x2)) -> (B, 10)
    x = jnp.concatenate([a, c], axis=1)     # (B, 30)
    x = _leaky(dense(x, wf1, bf1))
    x = _leaky(dense(x, wf2, bf2))
    return dense(x, wo, bo)                 # fc_out (f32 weights)


if __name__ == "__main__":
    key = jax.random.PRNGKey(0)
    kp, k1, k2 = jax.random.split(key, 3)

    batch = 8
    raw_params = init_sparse_nn_params(kp)
    kernel_params = pack_params(raw_params)
    x1 = jax.random.normal(k1, (batch, 300), jnp.float32)
    x2 = jax.random.normal(k2, (batch, 12), jnp.float32)

    out = sparse_nn_forward(x1, x2, kernel_params)
    out = jax.block_until_ready(out)

    ref = _reference_forward(x1, x2, raw_params)
    assert out.shape == (batch, 1)
    err = float(jnp.max(jnp.abs(out - ref)))
    assert jnp.allclose(out, ref, atol=1e-2, rtol=1e-2), f"max abs err {err}"

    print("KERNEL_OK")
</pallas_src>

<mosaic_0001>
module attributes {stable_mosaic.version = 11 : i64} {
  func.func @sparse_nn_kernel(%arg0: i32, %arg1: memref<8x300xf32, #tpu.memory_space<vmem>>, %arg2: memref<8x12xf32, #tpu.memory_space<vmem>>, %arg3: memref<300x1024xbf16, #tpu.memory_space<vmem>>, %arg4: memref<1x1024xf32, #tpu.memory_space<vmem>>, %arg5: memref<1024x128xbf16, #tpu.memory_space<vmem>>, %arg6: memref<1x128xf32, #tpu.memory_space<vmem>>, %arg7: memref<12x30xbf16, #tpu.memory_space<vmem>>, %arg8: memref<1x30xf32, #tpu.memory_space<vmem>>, %arg9: memref<30x128xbf16, #tpu.memory_space<vmem>>, %arg10: memref<1x128xf32, #tpu.memory_space<vmem>>, %arg11: memref<256x30xbf16, #tpu.memory_space<vmem>>, %arg12: memref<1x30xf32, #tpu.memory_space<vmem>>, %arg13: memref<30x128xbf16, #tpu.memory_space<vmem>>, %arg14: memref<1x128xf32, #tpu.memory_space<vmem>>, %arg15: memref<128x10xbf16, #tpu.memory_space<vmem>>, %arg16: memref<1x10xf32, #tpu.memory_space<vmem>>, %arg17: memref<1x10xf32, #tpu.memory_space<vmem>>, %arg18: memref<1x1xf32, #tpu.memory_space<vmem>>, %arg19: memref<8x1xf32, #tpu.memory_space<vmem>>, %arg20: memref<8x256xbf16, #tpu.memory_space<vmem>>) attributes {dimension_semantics = [#tpu.dimension_semantics<parallel>], iteration_bounds = array<i64: 1>, scalar_prefetch = 0 : i64, scratch_operands = 1 : i64, tpu.core_type = #tpu.core_type<tc>, window_params = [{transform_indices = @transform_0, window_bounds = array<i64: 8, 300>}, {transform_indices = @transform_1, window_bounds = array<i64: 8, 12>}, {pipeline_mode = #tpu.pipeline_mode<synchronous>, transform_indices = @transform_2, window_bounds = array<i64: 300, 1024>}, {pipeline_mode = #tpu.pipeline_mode<synchronous>, transform_indices = @transform_3, window_bounds = array<i64: 1, 1024>}, {pipeline_mode = #tpu.pipeline_mode<synchronous>, transform_indices = @transform_4, window_bounds = array<i64: 1024, 128>}, {pipeline_mode = #tpu.pipeline_mode<synchronous>, transform_indices = @transform_5, window_bounds = array<i64: 1, 128>}, {pipeline_mode = #tpu.pipeline_mode<synchronous>, transform_indices = @transform_6, window_bounds = array<i64: 12, 30>}, {pipeline_mode = #tpu.pipeline_mode<synchronous>, transform_indices = @transform_7, window_bounds = array<i64: 1, 30>}, {pipeline_mode = #tpu.pipeline_mode<synchronous>, transform_indices = @transform_8, window_bounds = array<i64: 30, 128>}, {pipeline_mode = #tpu.pipeline_mode<synchronous>, transform_indices = @transform_9, window_bounds = array<i64: 1, 128>}, {pipeline_mode = #tpu.pipeline_mode<synchronous>, transform_indices = @transform_10, window_bounds = array<i64: 256, 30>}, {pipeline_mode = #tpu.pipeline_mode<synchronous>, transform_indices = @transform_11, window_bounds = array<i64: 1, 30>}, {pipeline_mode = #tpu.pipeline_mode<synchronous>, transform_indices = @transform_12, window_bounds = array<i64: 30, 128>}, {pipeline_mode = #tpu.pipeline_mode<synchronous>, transform_indices = @transform_13, window_bounds = array<i64: 1, 128>}, {pipeline_mode = #tpu.pipeline_mode<synchronous>, transform_indices = @transform_14, window_bounds = array<i64: 128, 10>}, {pipeline_mode = #tpu.pipeline_mode<synchronous>, transform_indices = @transform_15, window_bounds = array<i64: 1, 10>}, {pipeline_mode = #tpu.pipeline_mode<synchronous>, transform_indices = @transform_16, window_bounds = array<i64: 1, 10>}, {pipeline_mode = #tpu.pipeline_mode<synchronous>, transform_indices = @transform_17, window_bounds = array<i64: 1, 1>}, {transform_indices = @transform_18, window_bounds = array<i64: 8, 1>}]} {
    %c0 = arith.constant 0 : index
    %c0_0 = arith.constant 0 : index
    %0 = vector.load %arg1[%c0, %c0_0] : memref<8x300xf32, #tpu.memory_space<vmem>>, vector<8x300xf32>
    %1 = arith.truncf %0 : vector<8x300xf32> to vector<8x300xbf16>
    %c0_1 = arith.constant 0 : index
    %c0_2 = arith.constant 0 : index
    %2 = vector.load %arg3[%c0_1, %c0_2] : memref<300x1024xbf16, #tpu.memory_space<vmem>>, vector<300x1024xbf16>
    %cst = arith.constant dense<0.000000e+00> : vector<8x1024xf32>
    %3 = tpu.matmul %1, %2, %cst {dimension_numbers = #tpu.dot_dimension_numbers<[1], [0], [0], [1], [0, 0, 1, 1], [], []>} : vector<8x300xbf16>, vector<300x1024xbf16>, vector<8x1024xf32> -> vector<8x1024xf32>
    %c0_3 = arith.constant 0 : index
    %c0_4 = arith.constant 0 : index
    %4 = vector.load %arg4[%c0_3, %c0_4] : memref<1x1024xf32, #tpu.memory_space<vmem>>, vector<1x1024xf32>
    %5 = vector.broadcast %4 : vector<1x1024xf32> to vector<8x1024xf32>
    %6 = arith.addf %3, %5 : vector<8x1024xf32>
    %cst_5 = arith.constant 0.000000e+00 : f32
    %7 = vector.broadcast %cst_5 : f32 to vector<8x1024xf32>
    %8 = arith.cmpf ogt, %6, %7 : vector<8x1024xf32>
    %cst_6 = arith.constant 1.000000e-01 : f32
    %9 = vector.broadcast %cst_6 : f32 to vector<8x1024xf32>
    %10 = arith.mulf %9, %6 : vector<8x1024xf32>
    %11 = arith.select %8, %6, %10 : vector<8x1024xi1>, vector<8x1024xf32>
    %12 = arith.truncf %11 : vector<8x1024xf32> to vector<8x1024xbf16>
    %c0_7 = arith.constant 0 : index
    %c0_8 = arith.constant 0 : index
    %13 = vector.load %arg5[%c0_7, %c0_8] : memref<1024x128xbf16, #tpu.memory_space<vmem>>, vector<1024x128xbf16>
    %cst_9 = arith.constant dense<0.000000e+00> : vector<8x128xf32>
    %14 = tpu.matmul %12, %13, %cst_9 {dimension_numbers = #tpu.dot_dimension_numbers<[1], [0], [0], [1], [0, 0, 1, 1], [], []>} : vector<8x1024xbf16>, vector<1024x128xbf16>, vector<8x128xf32> -> vector<8x128xf32>
    %c0_10 = arith.constant 0 : index
    %c0_11 = arith.constant 0 : index
    %15 = vector.load %arg6[%c0_10, %c0_11] : memref<1x128xf32, #tpu.memory_space<vmem>>, vector<1x128xf32>
    %16 = vector.broadcast %15 : vector<1x128xf32> to vector<8x128xf32>
    %17 = arith.addf %14, %16 : vector<8x128xf32>
    %cst_12 = arith.constant 0.000000e+00 : f32
    %18 = vector.broadcast %cst_12 : f32 to vector<8x128xf32>
    %19 = arith.cmpf ogt, %17, %18 : vector<8x128xf32>
    %cst_13 = arith.constant 1.000000e-01 : f32
    %20 = vector.broadcast %cst_13 : f32 to vector<8x128xf32>
    %21 = arith.mulf %20, %17 : vector<8x128xf32>
    %22 = arith.select %19, %17, %21 : vector<8x128xi1>, vector<8x128xf32>
    %23 = arith.truncf %22 : vector<8x128xf32> to vector<8x128xbf16>
    %c0_14 = arith.constant 0 : index
    %c0_15 = arith.constant 0 : index
    %24 = vector.load %arg2[%c0_14, %c0_15] : memref<8x12xf32, #tpu.memory_space<vmem>>, vector<8x12xf32>
    %25 = arith.truncf %24 : vector<8x12xf32> to vector<8x12xbf16>
    %c0_16 = arith.constant 0 : index
    %c0_17 = arith.constant 0 : index
    %26 = vector.load %arg7[%c0_16, %c0_17] : memref<12x30xbf16, #tpu.memory_space<vmem>>, vector<12x30xbf16>
    %cst_18 = arith.constant dense<0.000000e+00> : vector<8x30xf32>
    %27 = tpu.matmul %25, %26, %cst_18 {dimension_numbers = #tpu.dot_dimension_numbers<[1], [0], [0], [1], [0, 0, 1, 1], [], []>} : vector<8x12xbf16>, vector<12x30xbf16>, vector<8x30xf32> -> vector<8x30xf32>
    %c0_19 = arith.constant 0 : index
    %c0_20 = arith.constant 0 : index
    %28 = vector.load %arg8[%c0_19, %c0_20] : memref<1x30xf32, #tpu.memory_space<vmem>>, vector<1x30xf32>
    %29 = vector.broadcast %28 : vector<1x30xf32> to vector<8x30xf32>
    %30 = arith.addf %27, %29 : vector<8x30xf32>
    %cst_21 = arith.constant 0.000000e+00 : f32
    %31 = vector.broadcast %cst_21 : f32 to vector<8x30xf32>
    %32 = arith.cmpf ogt, %30, %31 : vector<8x30xf32>
    %cst_22 = arith.constant 1.000000e-01 : f32
    %33 = vector.broadcast %cst_22 : f32 to vector<8x30xf32>
    %34 = arith.mulf %33, %30 : vector<8x30xf32>
    %35 = arith.select %32, %30, %34 : vector<8x30xi1>, vector<8x30xf32>
    %36 = arith.truncf %35 : vector<8x30xf32> to vector<8x30xbf16>
    %c0_23 = arith.constant 0 : index
    %c0_24 = arith.constant 0 : index
    %37 = vector.load %arg9[%c0_23, %c0_24] : memref<30x128xbf16, #tpu.memory_space<vmem>>, vector<30x128xbf16>
    %cst_25 = arith.constant dense<0.000000e+00> : vector<8x128xf32>
    %38 = tpu.matmul %36, %37, %cst_25 {dimension_numbers = #tpu.dot_dimension_numbers<[1], [0], [0], [1], [0, 0, 1, 1], [], []>} : vector<8x30xbf16>, vector<30x128xbf16>, vector<8x128xf32> -> vector<8x128xf32>
    %c0_26 = arith.constant 0 : index
    %c0_27 = arith.constant 0 : index
    %39 = vector.load %arg10[%c0_26, %c0_27] : memref<1x128xf32, #tpu.memory_space<vmem>>, vector<1x128xf32>
    %40 = vector.broadcast %39 : vector<1x128xf32> to vector<8x128xf32>
    %41 = arith.addf %38, %40 : vector<8x128xf32>
    %cst_28 = arith.constant 0.000000e+00 : f32
    %42 = vector.broadcast %cst_28 : f32 to vector<8x128xf32>
    %43 = arith.cmpf ogt, %41, %42 : vector<8x128xf32>
    %cst_29 = arith.constant 1.000000e-01 : f32
    %44 = vector.broadcast %cst_29 : f32 to vector<8x128xf32>
    %45 = arith.mulf %44, %41 : vector<8x128xf32>
    %46 = arith.select %43, %41, %45 : vector<8x128xi1>, vector<8x128xf32>
    %47 = arith.truncf %46 : vector<8x128xf32> to vector<8x128xbf16>
    %c0_30 = arith.constant 0 : index
    %c0_31 = arith.constant 0 : index
    %48 = vector.load %arg20[%c0_30, %c0_31] : memref<8x256xbf16, #tpu.memory_space<vmem>>, vector<8x128xbf16>
    tpu.vector_store %arg20[%c0_30, %c0_31], %23 {strides = array<i32>} : memref<8x256xbf16, #tpu.memory_space<vmem>>, vector<8x128xbf16>,
    %c0_32 = arith.constant 0 : index
    %c128 = arith.constant 128 : index
    %49 = vector.load %arg20[%c0_32, %c128] : memref<8x256xbf16, #tpu.memory_space<vmem>>, vector<8x128xbf16>
    tpu.vector_store %arg20[%c0_32, %c128], %47 {strides = array<i32>} : memref<8x256xbf16, #tpu.memory_space<vmem>>, vector<8x128xbf16>,
    %c0_33 = arith.constant 0 : index
    %c0_34 = arith.constant 0 : index
    %50 = vector.load %arg20[%c0_33, %c0_34] : memref<8x256xbf16, #tpu.memory_space<vmem>>, vector<8x256xbf16>
    %c0_35 = arith.constant 0 : index
    %c0_36 = arith.constant 0 : index
    %51 = vector.load %arg11[%c0_35, %c0_36] : memref<256x30xbf16, #tpu.memory_space<vmem>>, vector<256x30xbf16>
    %cst_37 = arith.constant dense<0.000000e+00> : vector<8x30xf32>
    %52 = tpu.matmul %50, %51, %cst_37 {dimension_numbers = #tpu.dot_dimension_numbers<[1], [0], [0], [1], [0, 0, 1, 1], [], []>} : vector<8x256xbf16>, vector<256x30xbf16>, vector<8x30xf32> -> vector<8x30xf32>
    %c0_38 = arith.constant 0 : index
    %c0_39 = arith.constant 0 : index
    %53 = vector.load %arg12[%c0_38, %c0_39] : memref<1x30xf32, #tpu.memory_space<vmem>>, vector<1x30xf32>
    %54 = vector.broadcast %53 : vector<1x30xf32> to vector<8x30xf32>
    %55 = arith.addf %52, %54 : vector<8x30xf32>
    %cst_40 = arith.constant 0.000000e+00 : f32
    %56 = vector.broadcast %cst_40 : f32 to vector<8x30xf32>
    %57 = arith.cmpf ogt, %55, %56 : vector<8x30xf32>
    %cst_41 = arith.constant 1.000000e-01 : f32
    %58 = vector.broadcast %cst_41 : f32 to vector<8x30xf32>
    %59 = arith.mulf %58, %55 : vector<8x30xf32>
    %60 = arith.select %57, %55, %59 : vector<8x30xi1>, vector<8x30xf32>
    %61 = arith.truncf %60 : vector<8x30xf32> to vector<8x30xbf16>
    %c0_42 = arith.constant 0 : index
    %c0_43 = arith.constant 0 : index
    %62 = vector.load %arg13[%c0_42, %c0_43] : memref<30x128xbf16, #tpu.memory_space<vmem>>, vector<30x128xbf16>
    %cst_44 = arith.constant dense<0.000000e+00> : vector<8x128xf32>
    %63 = tpu.matmul %61, %62, %cst_44 {dimension_numbers = #tpu.dot_dimension_numbers<[1], [0], [0], [1], [0, 0, 1, 1], [], []>} : vector<8x30xbf16>, vector<30x128xbf16>, vector<8x128xf32> -> vector<8x128xf32>
    %c0_45 = arith.constant 0 : index
    %c0_46 = arith.constant 0 : index
    %64 = vector.load %arg14[%c0_45, %c0_46] : memref<1x128xf32, #tpu.memory_space<vmem>>, vector<1x128xf32>
    %65 = vector.broadcast %64 : vector<1x128xf32> to vector<8x128xf32>
    %66 = arith.addf %63, %65 : vector<8x128xf32>
    %cst_47 = arith.constant 0.000000e+00 : f32
    %67 = vector.broadcast %cst_47 : f32 to vector<8x128xf32>
    %68 = arith.cmpf ogt, %66, %67 : vector<8x128xf32>
    %cst_48 = arith.constant 1.000000e-01 : f32
    %69 = vector.broadcast %cst_48 : f32 to vector<8x128xf32>
    %70 = arith.mulf %69, %66 : vector<8x128xf32>
    %71 = arith.select %68, %66, %70 : vector<8x128xi1>, vector<8x128xf32>
    %72 = arith.truncf %71 : vector<8x128xf32> to vector<8x128xbf16>
    %c0_49 = arith.constant 0 : index
    %c0_50 = arith.constant 0 : index
    %73 = vector.load %arg15[%c0_49, %c0_50] : memref<128x10xbf16, #tpu.memory_space<vmem>>, vector<128x10xbf16>
    %cst_51 = arith.constant dense<0.000000e+00> : vector<8x10xf32>
    %74 = tpu.matmul %72, %73, %cst_51 {dimension_numbers = #tpu.dot_dimension_numbers<[1], [0], [0], [1], [0, 0, 1, 1], [], []>} : vector<8x128xbf16>, vector<128x10xbf16>, vector<8x10xf32> -> vector<8x10xf32>
    %c0_52 = arith.constant 0 : index
    %c0_53 = arith.constant 0 : index
    %75 = vector.load %arg16[%c0_52, %c0_53] : memref<1x10xf32, #tpu.memory_space<vmem>>, vector<1x10xf32>
    %76 = vector.broadcast %75 : vector<1x10xf32> to vector<8x10xf32>
    %77 = arith.addf %74, %76 : vector<8x10xf32>
    %cst_54 = arith.constant 0.000000e+00 : f32
    %78 = vector.broadcast %cst_54 : f32 to vector<8x10xf32>
    %79 = arith.cmpf ogt, %77, %78 : vector<8x10xf32>
    %cst_55 = arith.constant 1.000000e-01 : f32
    %80 = vector.broadcast %cst_55 : f32 to vector<8x10xf32>
    %81 = arith.mulf %80, %77 : vector<8x10xf32>
    %82 = arith.select %79, %77, %81 : vector<8x10xi1>, vector<8x10xf32>
    %c0_56 = arith.constant 0 : index
    %c0_57 = arith.constant 0 : index
    %83 = vector.load %arg17[%c0_56, %c0_57] : memref<1x10xf32, #tpu.memory_space<vmem>>, vector<1x10xf32>
    %84 = vector.broadcast %83 : vector<1x10xf32> to vector<8x10xf32>
    %85 = arith.mulf %82, %84 : vector<8x10xf32>
    %cst_58 = arith.constant dense<0.000000e+00> : vector<8xf32>
    %86 = vector.multi_reduction <add>, %85, %cst_58 [1] : vector<8x10xf32> to vector<8xf32>
    %87 = vector.shape_cast %86 : vector<8xf32> to vector<8x1xf32>
    %c0_59 = arith.constant 0 : index
    %c0_60 = arith.constant 0 : index
    %88 = vector.load %arg18[%c0_59, %c0_60] : memref<1x1xf32, #tpu.memory_space<vmem>>, vector<1x1xf32>
    %89 = vector.broadcast %88 : vector<1x1xf32> to vector<8x1xf32>
    %90 = arith.addf %87, %89 : vector<8x1xf32>
    %c0_61 = arith.constant 0 : index
    %c0_62 = arith.constant 0 : index
    %91 = vector.load %arg19[%c0_61, %c0_62] : memref<8x1xf32, #tpu.memory_space<vmem>>, vector<8x1xf32>
    tpu.vector_store %arg19[%c0_61, %c0_62], %90 {strides = array<i32>} : memref<8x1xf32, #tpu.memory_space<vmem>>, vector<8x1xf32>,
    return
  }
  func.func @transform_0(%arg0: i32) -> (i32, i32) {
    %c0_i32 = arith.constant 0 : i32
    %c0_i32_0 = arith.constant 0 : i32
    return %arg0, %c0_i32 : i32, i32
  }
  func.func @transform_1(%arg0: i32) -> (i32, i32) {
    %c0_i32 = arith.constant 0 : i32
    %c0_i32_0 = arith.constant 0 : i32
    return %arg0, %c0_i32 : i32, i32
  }
  func.func @transform_2(%arg0: i32) -> (i32, i32) {
    %c0_i32 = arith.constant 0 : i32
    %c0_i32_0 = arith.constant 0 : i32
    %c0_i32_1 = arith.constant 0 : i32
    return %c0_i32, %c0_i32_0 : i32, i32
  }
  func.func @transform_3(%arg0: i32) -> (i32, i32) {
    %c0_i32 = arith.constant 0 : i32
    %c0_i32_0 = arith.constant 0 : i32
    %c0_i32_1 = arith.constant 0 : i32
    return %c0_i32, %c0_i32_0 : i32, i32
  }
  func.func @transform_4(%arg0: i32) -> (i32, i32) {
    %c0_i32 = arith.constant 0 : i32
    %c0_i32_0 = arith.constant 0 : i32
    %c0_i32_1 = arith.constant 0 : i32
    return %c0_i32, %c0_i32_0 : i32, i32
  }
  func.func @transform_5(%arg0: i32) -> (i32, i32) {
    %c0_i32 = arith.constant 0 : i32
    %c0_i32_0 = arith.constant 0 : i32
    %c0_i32_1 = arith.constant 0 : i32
    return %c0_i32, %c0_i32_0 : i32, i32
  }
  func.func @transform_6(%arg0: i32) -> (i32, i32) {
    %c0_i32 = arith.constant 0 : i32
    %c0_i32_0 = arith.constant 0 : i32
    %c0_i32_1 = arith.constant 0 : i32
    return %c0_i32, %c0_i32_0 : i32, i32
  }
  func.func @transform_7(%arg0: i32) -> (i32, i32) {
    %c0_i32 = arith.constant 0 : i32
    %c0_i32_0 = arith.constant 0 : i32
    %c0_i32_1 = arith.constant 0 : i32
    return %c0_i32, %c0_i32_0 : i32, i32
  }
  func.func @transform_8(%arg0: i32) -> (i32, i32) {
    %c0_i32 = arith.constant 0 : i32
    %c0_i32_0 = arith.constant 0 : i32
    %c0_i32_1 = arith.constant 0 : i32
    return %c0_i32, %c0_i32_0 : i32, i32
  }
  func.func @transform_9(%arg0: i32) -> (i32, i32) {
    %c0_i32 = arith.constant 0 : i32
    %c0_i32_0 = arith.constant 0 : i32
    %c0_i32_1 = arith.constant 0 : i32
    return %c0_i32, %c0_i32_0 : i32, i32
  }
  func.func @transform_10(%arg0: i32) -> (i32, i32) {
    %c0_i32 = arith.constant 0 : i32
    %c0_i32_0 = arith.constant 0 : i32
    %c0_i32_1 = arith.constant 0 : i32
    return %c0_i32, %c0_i32_0 : i32, i32
  }
  func.func @transform_11(%arg0: i32) -> (i32, i32) {
    %c0_i32 = arith.constant 0 : i32
    %c0_i32_0 = arith.constant 0 : i32
    %c0_i32_1 = arith.constant 0 : i32
    return %c0_i32, %c0_i32_0 : i32, i32
  }
  func.func @transform_12(%arg0: i32) -> (i32, i32) {
    %c0_i32 = arith.constant 0 : i32
    %c0_i32_0 = arith.constant 0 : i32
    %c0_i32_1 = arith.constant 0 : i32
    return %c0_i32, %c0_i32_0 : i32, i32
  }
  func.func @transform_13(%arg0: i32) -> (i32, i32) {
    %c0_i32 = arith.constant 0 : i32
    %c0_i32_0 = arith.constant 0 : i32
    %c0_i32_1 = arith.constant 0 : i32
    return %c0_i32, %c0_i32_0 : i32, i32
  }
  func.func @transform_14(%arg0: i32) -> (i32, i32) {
    %c0_i32 = arith.constant 0 : i32
    %c0_i32_0 = arith.constant 0 : i32
    %c0_i32_1 = arith.constant 0 : i32
    return %c0_i32, %c0_i32_0 : i32, i32
  }
  func.func @transform_15(%arg0: i32) -> (i32, i32) {
    %c0_i32 = arith.constant 0 : i32
    %c0_i32_0 = arith.constant 0 : i32
    %c0_i32_1 = arith.constant 0 : i32
    return %c0_i32, %c0_i32_0 : i32, i32
  }
  func.func @transform_16(%arg0: i32) -> (i32, i32) {
    %c0_i32 = arith.constant 0 : i32
    %c0_i32_0 = arith.constant 0 : i32
    %c0_i32_1 = arith.constant 0 : i32
    return %c0_i32, %c0_i32_0 : i32, i32
  }
  func.func @transform_17(%arg0: i32) -> (i32, i32) {
    %c0_i32 = arith.constant 0 : i32
    %c0_i32_0 = arith.constant 0 : i32
    %c0_i32_1 = arith.constant 0 : i32
    return %c0_i32, %c0_i32_0 : i32, i32
  }
  func.func @transform_18(%arg0: i32) -> (i32, i32) {
    %c0_i32 = arith.constant 0 : i32
    %c0_i32_0 = arith.constant 0 : i32
    return %arg0, %c0_i32 : i32, i32
  }
}

</mosaic_0001>

<llo_original>
// kernel: _sparse_nn_call.1
$region0: #{_sparse_nn_call.1}
  #allocation0 [shape = 'u32[]', space=smem, size = 0x4, offset = 0x4, fixed_abs, tag = 'smem constant byte address 0x4 - core index']
  #allocation1 [shape = 'u32[144,128]{1,0:T(1,128)}', space=vmem, size = 0x12000, scoped, tag = 'internal scratch']
  #allocation2 [shape = 'bf16[8,256]{1,0:T(8,128)(2,1)}', space=vmem, size = 0x1000, scoped, tag = 'scratch operand']
  #allocation3 [shape = 'f32[1,1]{1,0:T(1,128)S(1)}', space=vmem, size = 0x200, scoped, tag = 'scoped memory for _sparse_nn_call.1']
  %s0 = inlined_call_operand.vmem [shape: f32[8,300], index: 0, kind: input, shape index: {}]
  %s1 = inlined_call_operand.vmem [shape: f32[8,12], index: 1, kind: input, shape index: {}]
  %s2 = inlined_call_operand.hbm [shape: bf16[300,1024], index: 2, kind: input, shape index: {}]
  %s3 = inlined_call_operand.vmem [shape: f32[1,1024], index: 3, kind: input, shape index: {}]
  %s4 = inlined_call_operand.hbm [shape: bf16[1024,128], index: 4, kind: input, shape index: {}]
  %s5 = inlined_call_operand.vmem [shape: f32[1,128], index: 5, kind: input, shape index: {}]
  %s6 = inlined_call_operand.vmem [shape: bf16[12,30], index: 6, kind: input, shape index: {}]
  %s7 = inlined_call_operand.vmem [shape: f32[1,30], index: 7, kind: input, shape index: {}]
  %s8 = inlined_call_operand.vmem [shape: bf16[30,128], index: 8, kind: input, shape index: {}]
  %s9 = inlined_call_operand.vmem [shape: f32[1,128], index: 9, kind: input, shape index: {}]
  %s10 = inlined_call_operand.vmem [shape: bf16[256,30], index: 10, kind: input, shape index: {}]
  %s11 = inlined_call_operand.vmem [shape: f32[1,30], index: 11, kind: input, shape index: {}]
  %s12 = inlined_call_operand.vmem [shape: bf16[30,128], index: 12, kind: input, shape index: {}]
  %s13 = inlined_call_operand.vmem [shape: f32[1,128], index: 13, kind: input, shape index: {}]
  %s14 = inlined_call_operand.vmem [shape: bf16[128,10], index: 14, kind: input, shape index: {}]
  %s15 = inlined_call_operand.vmem [shape: f32[1,10], index: 15, kind: input, shape index: {}]
  %s16 = inlined_call_operand.vmem [shape: f32[1,10], index: 16, kind: input, shape index: {}]
  %s17 = inlined_call_operand.<no memory space> [shape: f32[1,1], index: 17, kind: input, shape index: {}]
  %s18 = inlined_call_operand.vmem [shape: f32[8,1], index: 18, kind: output, shape index: {}]
  %s19 = sld [smem:[#allocation0]]
  $region90: #{_sparse_nn_call.1} parent=0
    _
  %s21 = ssub.s32 1, %s19
  %s22 = scalar_select 0, %s21, %s19
  %v23 = vstv %s17
  %24 = vst [vmem:[#allocation3] sm:$0x1] %v23
  $region1: #{_sparse_nn_call.1} parent=0
    #allocation4 [shape = 'u8[622592]{0}', space=vmem, size = 0x98000, scoped, tag = 'input window, operand 2, single buffered']
    #allocation5 [shape = 's32[1]{0}', space=sflag, size = 0x4, scoped, tag = 'scoped memory for _sparse_nn_call.1']
    #allocation6 [shape = 'u8[262144]{0}', space=vmem, size = 0x40000, scoped, tag = 'input window, operand 4, single buffered']
    #allocation7 [shape = 's32[1]{0}', space=sflag, size = 0x4, scoped, tag = 'scoped memory for _sparse_nn_call.1']
    %25 = vsyncpa [#allocation5], 0
    %26 = vsyncpa [#allocation7], 0
    // Predicated region
    $region2: #{_sparse_nn_call.1} parent=1 // pred_check
      _
    $region3: #{_sparse_nn_call.1} parent=1 // pred_check_branch
      %28 = sbr.rel (0) target = $region5
    $region4: #{_sparse_nn_call.1} parent=1 // pred_region
      _
    $region5: #{_sparse_nn_call.1} parent=1 // pred_fallthru
      _
    // Predicated region
    $region6: #{_sparse_nn_call.1} parent=1 // pred_check
      _
    $region7: #{_sparse_nn_call.1} parent=1 // pred_check_branch
      %30 = sbr.rel (0) target = $region9
    $region8: #{_sparse_nn_call.1} parent=1 // pred_region
      _
    $region9: #{_sparse_nn_call.1} parent=1 // pred_fallthru
      _
    // Predicated region
    $region10: #{_sparse_nn_call.1} parent=1 // pred_check
      _
    $region11: #{_sparse_nn_call.1} parent=1 // pred_check_branch
      %32 = sbr.rel (0) target = $region13
    $region12: #{_sparse_nn_call.1} parent=1 // pred_region
      %s34 = ssub.s32 19456, 19456
      %35 = vsyncadd [#allocation5], %s34
      %s36 = sshll.u32 [#allocation4], 4
      %s37 = int_to_ptr.vmem [resolvable:$true] %s36
      %42 = dma.hbm_to_vmem [thread:$0]  %s2, 19456, %s37, [#allocation5], 512, 512, 32
    $region13: #{_sparse_nn_call.1} parent=1 // pred_fallthru
      _
    // Predicated region
    $region14: #{_sparse_nn_call.1} parent=1 // pred_check
      _
    $region15: #{_sparse_nn_call.1} parent=1 // pred_check_branch
      %44 = sbr.rel (0) target = $region17
    $region16: #{_sparse_nn_call.1} parent=1 // pred_region
      _
    $region17: #{_sparse_nn_call.1} parent=1 // pred_fallthru
      _
    // Predicated region
    $region18: #{_sparse_nn_call.1} parent=1 // pred_check
      _
    $region19: #{_sparse_nn_call.1} parent=1 // pred_check_branch
      %46 = sbr.rel (0) target = $region21
    $region20: #{_sparse_nn_call.1} parent=1 // pred_region
      %s48 = ssub.s32 8192, 8192
      %49 = vsyncadd [#allocation7], %s48
      %s50 = sshll.u32 [#allocation6], 4
      %s51 = int_to_ptr.vmem [resolvable:$true] %s50
      %56 = dma.hbm_to_vmem [thread:$0]  %s4, 8192, %s51, [#allocation7], 64, 64, 4
    $region21: #{_sparse_nn_call.1} parent=1 // pred_fallthru
      _
    // Predicated region
    $region22: #{_sparse_nn_call.1} parent=1 // pred_check
      _
    $region23: #{_sparse_nn_call.1} parent=1 // pred_check_branch
      %58 = sbr.rel (0) target = $region25
    $region24: #{_sparse_nn_call.1} parent=1 // pred_region
      _
    $region25: #{_sparse_nn_call.1} parent=1 // pred_fallthru
      _
    // Predicated region
    $region26: #{_sparse_nn_call.1} parent=1 // pred_check
      _
    $region27: #{_sparse_nn_call.1} parent=1 // pred_check_branch
      %60 = sbr.rel (0) target = $region29
    $region28: #{_sparse_nn_call.1} parent=1 // pred_region
      _
    $region29: #{_sparse_nn_call.1} parent=1 // pred_fallthru
      _
    // Predicated region
    $region30: #{_sparse_nn_call.1} parent=1 // pred_check
      _
    $region31: #{_sparse_nn_call.1} parent=1 // pred_check_branch
      %62 = sbr.rel (0) target = $region33
    $region32: #{_sparse_nn_call.1} parent=1 // pred_region
      _
    $region33: #{_sparse_nn_call.1} parent=1 // pred_fallthru
      _
    // Predicated region
    $region34: #{_sparse_nn_call.1} parent=1 // pred_check
      _
    $region35: #{_sparse_nn_call.1} parent=1 // pred_check_branch
      %64 = sbr.rel (0) target = $region37
    $region36: #{_sparse_nn_call.1} parent=1 // pred_region
      _
    $region37: #{_sparse_nn_call.1} parent=1 // pred_fallthru
      _
    // Predicated region
    $region38: #{_sparse_nn_call.1} parent=1 // pred_check
      _
    $region39: #{_sparse_nn_call.1} parent=1 // pred_check_branch
      %66 = sbr.rel (0) target = $region41
    $region40: #{_sparse_nn_call.1} parent=1 // pred_region
      _
    $region41: #{_sparse_nn_call.1} parent=1 // pred_fallthru
      _
    // Predicated region
    $region42: #{_sparse_nn_call.1} parent=1 // pred_check
      _
    $region43: #{_sparse_nn_call.1} parent=1 // pred_check_branch
      %68 = sbr.rel (0) target = $region45
    $region44: #{_sparse_nn_call.1} parent=1 // pred_region
      _
    $region45: #{_sparse_nn_call.1} parent=1 // pred_fallthru
      _
    // Predicated region
    $region46: #{_sparse_nn_call.1} parent=1 // pred_check
      _
    $region47: #{_sparse_nn_call.1} parent=1 // pred_check_branch
      %70 = sbr.rel (0) target = $region49
    $region48: #{_sparse_nn_call.1} parent=1 // pred_region
      _
    $region49: #{_sparse_nn_call.1} parent=1 // pred_fallthru
      _
    // Predicated region
    $region50: #{_sparse_nn_call.1} parent=1 // pred_check
      _
    $region51: #{_sparse_nn_call.1} parent=1 // pred_check_branch
      %72 = sbr.rel (0) target = $region53
    $region52: #{_sparse_nn_call.1} parent=1 // pred_region
      _
    $region53: #{_sparse_nn_call.1} parent=1 // pred_fallthru
      _
    // Predicated region
    $region54: #{_sparse_nn_call.1} parent=1 // pred_check
      _
    $region55: #{_sparse_nn_call.1} parent=1 // pred_check_branch
      %74 = sbr.rel (0) target = $region57
    $region56: #{_sparse_nn_call.1} parent=1 // pred_region
      _
    $region57: #{_sparse_nn_call.1} parent=1 // pred_fallthru
      _
    // Predicated region
    $region58: #{_sparse_nn_call.1} parent=1 // pred_check
      _
    $region59: #{_sparse_nn_call.1} parent=1 // pred_check_branch
      %76 = sbr.rel (0) target = $region61
    $region60: #{_sparse_nn_call.1} parent=1 // pred_region
      _
    $region61: #{_sparse_nn_call.1} parent=1 // pred_fallthru
      _
    // Predicated region
    $region62: #{_sparse_nn_call.1} parent=1 // pred_check
      _
    $region63: #{_sparse_nn_call.1} parent=1 // pred_check_branch
      %78 = sbr.rel (0) target = $region65
    $region64: #{_sparse_nn_call.1} parent=1 // pred_region
      _
    $region65: #{_sparse_nn_call.1} parent=1 // pred_fallthru
      _
    // Predicated region
    $region66: #{_sparse_nn_call.1} parent=1 // pred_check
      _
    $region67: #{_sparse_nn_call.1} parent=1 // pred_check_branch
      %80 = sbr.rel (0) target = $region69
    $region68: #{_sparse_nn_call.1} parent=1 // pred_region
      _
    $region69: #{_sparse_nn_call.1} parent=1 // pred_fallthru
      _
    // Predicated region
    $region70: #{_sparse_nn_call.1} parent=1 // pred_check
      _
    $region71: #{_sparse_nn_call.1} parent=1 // pred_check_branch
      %82 = sbr.rel (0) target = $region73
    $region72: #{_sparse_nn_call.1} parent=1 // pred_region
      _
    $region73: #{_sparse_nn_call.1} parent=1 // pred_fallthru
      _
    // Predicated region
    $region74: #{_sparse_nn_call.1} parent=1 // pred_check
      _
    $region75: #{_sparse_nn_call.1} parent=1 // pred_check_branch
      %84 = sbr.rel (0) target = $region77
    $region76: #{_sparse_nn_call.1} parent=1 // pred_region
      %85 = dma.done [#allocation5], 19456
    $region77: #{_sparse_nn_call.1} parent=1 // pred_fallthru
      _
    // Predicated region
    $region78: #{_sparse_nn_call.1} parent=1 // pred_check
      _
    $region79: #{_sparse_nn_call.1} parent=1 // pred_check_branch
      %87 = sbr.rel (0) target = $region81
    $region80: #{_sparse_nn_call.1} parent=1 // pred_region
      %88 = dma.done [#allocation7], 8192
    $region81: #{_sparse_nn_call.1} parent=1 // pred_fallthru
      _
    %v90 = vld [vmem:[%s0] sm:$0xff]
    %v91 = vld [vmem:[%s0 + $0x8] sm:$0xff]
    %v92 = vld [vmem:[%s0 + $0x10] sm:$0xff]
    %v93 = vpack.c.bf16 %v90, %v90
    %v94 = vpack.c.bf16 %v91, %v91
    %v95 = vpack.c.bf16 %v92, %v92
    %v96 = vld [vmem:[#allocation4] sm:$0xff]
    %v97 = vld [vmem:[#allocation4 + $0x8] sm:$0xff]
    %v98 = vld [vmem:[#allocation4 + $0x10] sm:$0xff]
    %v99 = vld [vmem:[#allocation4 + $0x18] sm:$0xff]
    %v100 = vld [vmem:[#allocation4 + $0x20] sm:$0xff]
    %v101 = vld [vmem:[#allocation4 + $0x28] sm:$0xff]
    %v102 = vld [vmem:[#allocation4 + $0x30] sm:$0xff]
    %v103 = vld [vmem:[#allocation4 + $0x38] sm:$0xff]
    %v104 = vld [vmem:[#allocation4 + $0x40] sm:$0xff]
    %v105 = vld [vmem:[#allocation4 + $0x48] sm:$0xff]
    %v106 = vld [vmem:[#allocation4 + $0x50] sm:$0xff]
    %v107 = vld [vmem:[#allocation4 + $0x58] sm:$0xff]
    %v108 = vld [vmem:[#allocation4 + $0x60] sm:$0xff]
    %v109 = vld [vmem:[#allocation4 + $0x68] sm:$0xff]
    %v110 = vld [vmem:[#allocation4 + $0x70] sm:$0xff]
    %v111 = vld [vmem:[#allocation4 + $0x78] sm:$0xff]
    %v112 = vld [vmem:[#allocation4 + $0x80] sm:$0xff]
    %v113 = vld [vmem:[#allocation4 + $0x88] sm:$0xff]
    %v114 = vld [vmem:[#allocation4 + $0x90] sm:$0xff]
    %v115 = vld [vmem:[#allocation4 + $0x98] sm:$0xff]
    %v116 = vld [vmem:[#allocation4 + $0xa0] sm:$0xff]
    %v117 = vld [vmem:[#allocation4 + $0xa8] sm:$0xff]
    %v118 = vld [vmem:[#allocation4 + $0xb0] sm:$0xff]
    %v119 = vld [vmem:[#allocation4 + $0xb8] sm:$0xff]
    %v120 = vld [vmem:[#allocation4 + $0xc0] sm:$0xff]
    %v121 = vld [vmem:[#allocation4 + $0xc8] sm:$0xff]
    %v122 = vld [vmem:[#allocation4 + $0xd0] sm:$0xff]
    %v123 = vld [vmem:[#allocation4 + $0xd8] sm:$0xff]
    %v124 = vld [vmem:[#allocation4 + $0xe0] sm:$0xff]
    %v125 = vld [vmem:[#allocation4 + $0xe8] sm:$0xff]
    %v126 = vld [vmem:[#allocation4 + $0xf0] sm:$0xff]
    %v127 = vld [vmem:[#allocation4 + $0xf8] sm:$0xff]
    %v128 = vld [vmem:[#allocation4 + $0x100] sm:$0xff]
    %v129 = vld [vmem:[#allocation4 + $0x108] sm:$0xff]
    %v130 = vld [vmem:[#allocation4 + $0x110] sm:$0xff]
    %v131 = vld [vmem:[#allocation4 + $0x118] sm:$0xff]
    %v132 = vld [vmem:[#allocation4 + $0x120] sm:$0xff]
    %v133 = vld [vmem:[#allocation4 + $0x128] sm:$0xff]
    %v134 = vld [vmem:[#allocation4 + $0x130] sm:$0xff]
    %v135 = vld [vmem:[#allocation4 + $0x138] sm:$0xff]
    %v136 = vld [vmem:[#allocation4 + $0x140] sm:$0xff]
    %v137 = vld [vmem:[#allocation4 + $0x148] sm:$0xff]
    %v138 = vld [vmem:[#allocation4 + $0x150] sm:$0xff]
    %v139 = vld [vmem:[#allocation4 + $0x158] sm:$0xff]
    %v140 = vld [vmem:[#allocation4 + $0x160] sm:$0xff]
    %v141 = vld [vmem:[#allocation4 + $0x168] sm:$0xff]
    %v142 = vld [vmem:[#allocation4 + $0x170] sm:$0xff]
    %v143 = vld [vmem:[#allocation4 + $0x178] sm:$0xff]
    %v144 = vld [vmem:[#allocation4 + $0x180] sm:$0xff]
    %v145 = vld [vmem:[#allocation4 + $0x188] sm:$0xff]
    %v146 = vld [vmem:[#allocation4 + $0x190] sm:$0xff]
    %v147 = vld [vmem:[#allocation4 + $0x198] sm:$0xff]
    %v148 = vld [vmem:[#allocation4 + $0x1a0] sm:$0xff]
    %v149 = vld [vmem:[#allocation4 + $0x1a8] sm:$0xff]
    %v150 = vld [vmem:[#allocation4 + $0x1b0] sm:$0xff]
    %v151 = vld [vmem:[#allocation4 + $0x1b8] sm:$0xff]
    %v152 = vld [vmem:[#allocation4 + $0x1c0] sm:$0xff]
    %v153 = vld [vmem:[#allocation4 + $0x1c8] sm:$0xff]
    %v154 = vld [vmem:[#allocation4 + $0x1d0] sm:$0xff]
    %v155 = vld [vmem:[#allocation4 + $0x1d8] sm:$0xff]
    %v156 = vld [vmem:[#allocation4 + $0x1e0] sm:$0xff]
    %v157 = vld [vmem:[#allocation4 + $0x1e8] sm:$0xff]
    %v158 = vld [vmem:[#allocation4 + $0x1f0] sm:$0xff]
    %v159 = vld [vmem:[#allocation4 + $0x1f8] sm:$0xff]
    %v160 = vld [vmem:[#allocation4 + $0x200] sm:$0xff]
    %v161 = vld [vmem:[#allocation4 + $0x208] sm:$0xff]
    %v162 = vld [vmem:[#allocation4 + $0x210] sm:$0xff]
    %v163 = vld [vmem:[#allocation4 + $0x218] sm:$0xff]
    %v164 = vld [vmem:[#allocation4 + $0x220] sm:$0xff]
    %v165 = vld [vmem:[#allocation4 + $0x228] sm:$0xff]
    %v166 = vld [vmem:[#allocation4 + $0x230] sm:$0xff]
    %v167 = vld [vmem:[#allocation4 + $0x238] sm:$0xff]
    %v168 = vld [vmem:[#allocation4 + $0x240] sm:$0xff]
    %v169 = vld [vmem:[#allocation4 + $0x248] sm:$0xff]
    %v170 = vld [vmem:[#allocation4 + $0x250] sm:$0xff]
    %v171 = vld [vmem:[#allocation4 + $0x258] sm:$0xff]
    %v172 = vld [vmem:[#allocation4 + $0x260] sm:$0xff]
    %v173 = vld [vmem:[#allocation4 + $0x268] sm:$0xff]
    %v174 = vld [vmem:[#allocation4 + $0x270] sm:$0xff]
    %v175 = vld [vmem:[#allocation4 + $0x278] sm:$0xff]
    %v176 = vld [vmem:[#allocation4 + $0x280] sm:$0xff]
    %v177 = vld [vmem:[#allocation4 + $0x288] sm:$0xff]
    %v178 = vld [vmem:[#allocation4 + $0x290] sm:$0xff]
    %v179 = vld [vmem:[#allocation4 + $0x298] sm:$0xff]
    %v180 = vld [vmem:[#allocation4 + $0x2a0] sm:$0xff]
    %v181 = vld [vmem:[#allocation4 + $0x2a8] sm:$0xff]
    %v182 = vld [vmem:[#allocation4 + $0x2b0] sm:$0xff]
    %v183 = vld [vmem:[#allocation4 + $0x2b8] sm:$0xff]
    %v184 = vld [vmem:[#allocation4 + $0x2c0] sm:$0xff]
    %v185 = vld [vmem:[#allocation4 + $0x2c8] sm:$0xff]
    %v186 = vld [vmem:[#allocation4 + $0x2d0] sm:$0xff]
    %v187 = vld [vmem:[#allocation4 + $0x2d8] sm:$0xff]
    %v188 = vld [vmem:[#allocation4 + $0x2e0] sm:$0xff]
    %v189 = vld [vmem:[#allocation4 + $0x2e8] sm:$0xff]
    %v190 = vld [vmem:[#allocation4 + $0x2f0] sm:$0xff]
    %v191 = vld [vmem:[#allocation4 + $0x2f8] sm:$0xff]
    %v192 = vld [vmem:[#allocation4 + $0x300] sm:$0xff]
    %v193 = vld [vmem:[#allocation4 + $0x308] sm:$0xff]
    %v194 = vld [vmem:[#allocation4 + $0x310] sm:$0xff]
    %v195 = vld [vmem:[#allocation4 + $0x318] sm:$0xff]
    %v196 = vld [vmem:[#allocation4 + $0x320] sm:$0xff]
    %v197 = vld [vmem:[#allocation4 + $0x328] sm:$0xff]
    %v198 = vld [vmem:[#allocation4 + $0x330] sm:$0xff]
    %v199 = vld [vmem:[#allocation4 + $0x338] sm:$0xff]
    %v200 = vld [vmem:[#allocation4 + $0x340] sm:$0xff]
    %v201 = vld [vmem:[#allocation4 + $0x348] sm:$0xff]
    %v202 = vld [vmem:[#allocation4 + $0x350] sm:$0xff]
    %v203 = vld [vmem:[#allocation4 + $0x358] sm:$0xff]
    %v204 = vld [vmem:[#allocation4 + $0x360] sm:$0xff]
    %v205 = vld [vmem:[#allocation4 + $0x368] sm:$0xff]
    %v206 = vld [vmem:[#allocation4 + $0x370] sm:$0xff]
    %v207 = vld [vmem:[#allocation4 + $0x378] sm:$0xff]
    %v208 = vld [vmem:[#allocation4 + $0x380] sm:$0xff]
    %v209 = vld [vmem:[#allocation4 + $0x388] sm:$0xff]
    %v210 = vld [vmem:[#allocation4 + $0x390] sm:$0xff]
    %v211 = vld [vmem:[#allocation4 + $0x398] sm:$0xff]
    %v212 = vld [vmem:[#allocation4 + $0x3a0] sm:$0xff]
    %v213 = vld [vmem:[#allocation4 + $0x3a8] sm:$0xff]
    %v214 = vld [vmem:[#allocation4 + $0x3b0] sm:$0xff]
    %v215 = vld [vmem:[#allocation4 + $0x3b8] sm:$0xff]
    %v216 = vld [vmem:[#allocation4 + $0x3c0] sm:$0xff]
    %v217 = vld [vmem:[#allocation4 + $0x3c8] sm:$0xff]
    %v218 = vld [vmem:[#allocation4 + $0x3d0] sm:$0xff]
    %v219 = vld [vmem:[#allocation4 + $0x3d8] sm:$0xff]
    %v220 = vld [vmem:[#allocation4 + $0x3e0] sm:$0xff]
    %v221 = vld [vmem:[#allocation4 + $0x3e8] sm:$0xff]
    %v222 = vld [vmem:[#allocation4 + $0x3f0] sm:$0xff]
    %v223 = vld [vmem:[#allocation4 + $0x3f8] sm:$0xff]
    %v224 = vld [vmem:[#allocation4 + $0x400] sm:$0xff]
    %v225 = vld [vmem:[#allocation4 + $0x408] sm:$0xff]
    %v226 = vld [vmem:[#allocation4 + $0x410] sm:$0xff]
    %v227 = vld [vmem:[#allocation4 + $0x418] sm:$0xff]
    %v228 = vld [vmem:[#allocation4 + $0x420] sm:$0xff]
    %v229 = vld [vmem:[#allocation4 + $0x428] sm:$0xff]
    %v230 = vld [vmem:[#allocation4 + $0x430] sm:$0xff]
    %v231 = vld [vmem:[#allocation4 + $0x438] sm:$0xff]
    %v232 = vld [vmem:[#allocation4 + $0x440] sm:$0xff]
    %v233 = vld [vmem:[#allocation4 + $0x448] sm:$0xff]
    %v234 = vld [vmem:[#allocation4 + $0x450] sm:$0xff]
    %v235 = vld [vmem:[#allocation4 + $0x458] sm:$0xff]
    %v236 = vld [vmem:[#allocation4 + $0x460] sm:$0xff]
    %v237 = vld [vmem:[#allocation4 + $0x468] sm:$0xff]
    %v238 = vld [vmem:[#allocation4 + $0x470] sm:$0xff]
    %v239 = vld [vmem:[#allocation4 + $0x478] sm:$0xff]
    %v240 = vld [vmem:[#allocation4 + $0x480] sm:$0xff]
    %v241 = vld [vmem:[#allocation4 + $0x488] sm:$0xff]
    %v242 = vld [vmem:[#allocation4 + $0x490] sm:$0xff]
    %v243 = vld [vmem:[#allocation4 + $0x498] sm:$0xff]
    %v244 = vld [vmem:[#allocation4 + $0x4a0] sm:$0x33]
    %v245 = vld [vmem:[#allocation4 + $0x4a8] sm:$0x33]
    %v246 = vld [vmem:[#allocation4 + $0x4b0] sm:$0x33]
    %v247 = vld [vmem:[#allocation4 + $0x4b8] sm:$0x33]
    %v248 = vld [vmem:[%s3] sm:$0xff]
    %v250 = vlaneseq
    %v251 = vshrl.u32 %v250, 7
    %v252 = vsub.s32 0, %v251
    %v253 = vrot.slane %v248, %v252
    %v254 = vlaneseq
    %v255 = vshrl.u32 %v254, 7
    %v256 = vsub.s32 1, %v255
    %v257 = vrot.slane %v248, %v256
    %v258 = vlaneseq
    %v259 = vshrl.u32 %v258, 7
    %v260 = vsub.s32 2, %v259
    %v261 = vrot.slane %v248, %v260
    %v262 = vlaneseq
    %v263 = vshrl.u32 %v262, 7
    %v264 = vsub.s32 3, %v263
    %v265 = vrot.slane %v248, %v264
    %v266 = vlaneseq
    %v267 = vshrl.u32 %v266, 7
    %v268 = vsub.s32 4, %v267
    %v269 = vrot.slane %v248, %v268
    %v270 = vlaneseq
    %v271 = vshrl.u32 %v270, 7
    %v272 = vsub.s32 5, %v271
    %v273 = vrot.slane %v248, %v272
    %v274 = vlaneseq
    %v275 = vshrl.u32 %v274, 7
    %v276 = vsub.s32 6, %v275
    %v277 = vrot.slane %v248, %v276
    %v278 = vlaneseq
    %v279 = vshrl.u32 %v278, 7
    %v280 = vsub.s32 7, %v279
    %v281 = vrot.slane %v248, %v280
    %v442 = vunpack.c.l.b16 %v96
    %v443 = vunpack.c.h.b16 %v96
    %v444 = vunpack.c.l.b16 %v97
    %v445 = vunpack.c.h.b16 %v97
    %v446 = vunpack.c.l.b16 %v98
    %v447 = vunpack.c.h.b16 %v98
    %v448 = vunpack.c.l.b16 %v99
    %v449 = vunpack.c.h.b16 %v99
    %v450 = vunpack.c.l.b16 %v100
    %v451 = vunpack.c.h.b16 %v100
    %v452 = vunpack.c.l.b16 %v101
    %v453 = vunpack.c.h.b16 %v101
    %v454 = vunpack.c.l.b16 %v102
    %v455 = vunpack.c.h.b16 %v102
    %v456 = vunpack.c.l.b16 %v103
    %v457 = vunpack.c.h.b16 %v103
    %v458 = vunpack.c.l.b16 %v104
    %v459 = vunpack.c.h.b16 %v104
    %v460 = vunpack.c.l.b16 %v105
    %v461 = vunpack.c.h.b16 %v105
    %v462 = vunpack.c.l.b16 %v106
    %v463 = vunpack.c.h.b16 %v106
    %v464 = vunpack.c.l.b16 %v107
    %v465 = vunpack.c.h.b16 %v107
    %v466 = vunpack.c.l.b16 %v108
    %v467 = vunpack.c.h.b16 %v108
    %v468 = vunpack.c.l.b16 %v109
    %v469 = vunpack.c.h.b16 %v109
    %v470 = vunpack.c.l.b16 %v110
    %v471 = vunpack.c.h.b16 %v110
    %v472 = vunpack.c.l.b16 %v111
    %v473 = vunpack.c.h.b16 %v111
    %v474 = vunpack.c.l.b16 %v112
    %v475 = vunpack.c.h.b16 %v112
    %v476 = vunpack.c.l.b16 %v113
    %v477 = vunpack.c.h.b16 %v113
    %v478 = vunpack.c.l.b16 %v114
    %v479 = vunpack.c.h.b16 %v114
    %v480 = vunpack.c.l.b16 %v115
    %v481 = vunpack.c.h.b16 %v115
    %v482 = vunpack.c.l.b16 %v116
    %v483 = vunpack.c.h.b16 %v116
    %v484 = vunpack.c.l.b16 %v117
    %v485 = vunpack.c.h.b16 %v117
    %v486 = vunpack.c.l.b16 %v118
    %v487 = vunpack.c.h.b16 %v118
    %v488 = vunpack.c.l.b16 %v119
    %v489 = vunpack.c.h.b16 %v119
    %v490 = vunpack.c.l.b16 %v120
    %v491 = vunpack.c.h.b16 %v120
    %v492 = vunpack.c.l.b16 %v121
    %v493 = vunpack.c.h.b16 %v121
    %v494 = vunpack.c.l.b16 %v122
    %v495 = vunpack.c.h.b16 %v122
    %v496 = vunpack.c.l.b16 %v123
    %v497 = vunpack.c.h.b16 %v123
    %v498 = vunpack.c.l.b16 %v124
    %v499 = vunpack.c.h.b16 %v124
    %v500 = vunpack.c.l.b16 %v125
    %v501 = vunpack.c.h.b16 %v125
    %v502 = vunpack.c.l.b16 %v126
    %v503 = vunpack.c.h.b16 %v126
    %v504 = vunpack.c.l.b16 %v127
    %v505 = vunpack.c.h.b16 %v127
    %v506 = vunpack.c.l.b16 %v128
    %v507 = vunpack.c.h.b16 %v128
    %v508 = vunpack.c.l.b16 %v129
    %v509 = vunpack.c.h.b16 %v129
    %v510 = vunpack.c.l.b16 %v130
    %v511 = vunpack.c.h.b16 %v130
    %v512 = vunpack.c.l.b16 %v131
    %v513 = vunpack.c.h.b16 %v131
    %v514 = vunpack.c.l.b16 %v132
    %v515 = vunpack.c.h.b16 %v132
    %v516 = vunpack.c.l.b16 %v133
    %v517 = vunpack.c.h.b16 %v133
    %v518 = vunpack.c.l.b16 %v134
    %v519 = vunpack.c.h.b16 %v134
    %v520 = vunpack.c.l.b16 %v135
    %v521 = vunpack.c.h.b16 %v135
    %v522 = vunpack.c.l.b16 %v136
    %v523 = vunpack.c.h.b16 %v136
    %v524 = vunpack.c.l.b16 %v137
    %v525 = vunpack.c.h.b16 %v137
    %v526 = vunpack.c.l.b16 %v138
    %v527 = vunpack.c.h.b16 %v138
    %v528 = vunpack.c.l.b16 %v139
    %v529 = vunpack.c.h.b16 %v139
    %v530 = vunpack.c.l.b16 %v140
    %v531 = vunpack.c.h.b16 %v140
    %v532 = vunpack.c.l.b16 %v141
    %v533 = vunpack.c.h.b16 %v141
    %v534 = vunpack.c.l.b16 %v142
    %v535 = vunpack.c.h.b16 %v142
    %v536 = vunpack.c.l.b16 %v143
    %v537 = vunpack.c.h.b16 %v143
    %v538 = vunpack.c.l.b16 %v144
    %v539 = vunpack.c.h.b16 %v144
    %v540 = vunpack.c.l.b16 %v145
    %v541 = vunpack.c.h.b16 %v145
    %v542 = vunpack.c.l.b16 %v146
    %v543 = vunpack.c.h.b16 %v146
    %v544 = vunpack.c.l.b16 %v147
    %v545 = vunpack.c.h.b16 %v147
    %v546 = vunpack.c.l.b16 %v148
    %v547 = vunpack.c.h.b16 %v148
    %v548 = vunpack.c.l.b16 %v149
    %v549 = vunpack.c.h.b16 %v149
    %v550 = vunpack.c.l.b16 %v150
    %v551 = vunpack.c.h.b16 %v150
    %v552 = vunpack.c.l.b16 %v151
    %v553 = vunpack.c.h.b16 %v151
    %v554 = vunpack.c.l.b16 %v152
    %v555 = vunpack.c.h.b16 %v152
    %v556 = vunpack.c.l.b16 %v153
    %v557 = vunpack.c.h.b16 %v153
    %v558 = vunpack.c.l.b16 %v154
    %v559 = vunpack.c.h.b16 %v154
    %v560 = vunpack.c.l.b16 %v155
    %v561 = vunpack.c.h.b16 %v155
    %v562 = vunpack.c.l.b16 %v156
    %v563 = vunpack.c.h.b16 %v156
    %v564 = vunpack.c.l.b16 %v157
    %v565 = vunpack.c.h.b16 %v157
    %v566 = vunpack.c.l.b16 %v158
    %v567 = vunpack.c.h.b16 %v158
    %v568 = vunpack.c.l.b16 %v159
    %v569 = vunpack.c.h.b16 %v159
    %v570 = vunpack.c.l.b16 %v160
    %v571 = vunpack.c.h.b16 %v160
    %v572 = vunpack.c.l.b16 %v161
    %v573 = vunpack.c.h.b16 %v161
    %v574 = vunpack.c.l.b16 %v162
    %v575 = vunpack.c.h.b16 %v162
    %v576 = vunpack.c.l.b16 %v163
    %v577 = vunpack.c.h.b16 %v163
    %v578 = vunpack.c.l.b16 %v164
    %v579 = vunpack.c.h.b16 %v164
    %v580 = vunpack.c.l.b16 %v165
    %v581 = vunpack.c.h.b16 %v165
    %v582 = vunpack.c.l.b16 %v166
    %v583 = vunpack.c.h.b16 %v166
    %v584 = vunpack.c.l.b16 %v167
    %v585 = vunpack.c.h.b16 %v167
    %v586 = vunpack.c.l.b16 %v168
    %v587 = vunpack.c.h.b16 %v168
    %v588 = vunpack.c.l.b16 %v169
    %v589 = vunpack.c.h.b16 %v169
    %v590 = vunpack.c.l.b16 %v170
    %v591 = vunpack.c.h.b16 %v170
    %v592 = vunpack.c.l.b16 %v171
    %v593 = vunpack.c.h.b16 %v171
    %v594 = vunpack.c.l.b16 %v172
    %v595 = vunpack.c.h.b16 %v172
    %v596 = vunpack.c.l.b16 %v173
    %v597 = vunpack.c.h.b16 %v173
    %v598 = vunpack.c.l.b16 %v174
    %v599 = vunpack.c.h.b16 %v174
    %v600 = vunpack.c.l.b16 %v175
    %v601 = vunpack.c.h.b16 %v175
    %v602 = vunpack.c.l.b16 %v176
    %v603 = vunpack.c.h.b16 %v176
    %v604 = vunpack.c.l.b16 %v177
    %v605 = vunpack.c.h.b16 %v177
    %v606 = vunpack.c.l.b16 %v178
    %v607 = vunpack.c.h.b16 %v178
    %v608 = vunpack.c.l.b16 %v179
    %v609 = vunpack.c.h.b16 %v179
    %v610 = vunpack.c.l.b16 %v180
    %v611 = vunpack.c.h.b16 %v180
    %v612 = vunpack.c.l.b16 %v181
    %v613 = vunpack.c.h.b16 %v181
    %v614 = vunpack.c.l.b16 %v182
    %v615 = vunpack.c.h.b16 %v182
    %v616 = vunpack.c.l.b16 %v183
    %v617 = vunpack.c.h.b16 %v183
    %v618 = vunpack.c.l.b16 %v184
    %v619 = vunpack.c.h.b16 %v184
    %v620 = vunpack.c.l.b16 %v185
    %v621 = vunpack.c.h.b16 %v185
    %v622 = vunpack.c.l.b16 %v186
    %v623 = vunpack.c.h.b16 %v186
    %v624 = vunpack.c.l.b16 %v187
    %v625 = vunpack.c.h.b16 %v187
    %v626 = vunpack.c.l.b16 %v188
    %v627 = vunpack.c.h.b16 %v188
    %v628 = vunpack.c.l.b16 %v189
    %v629 = vunpack.c.h.b16 %v189
    %v630 = vunpack.c.l.b16 %v190
    %v631 = vunpack.c.h.b16 %v190
    %v632 = vunpack.c.l.b16 %v191
    %v633 = vunpack.c.h.b16 %v191
    %v634 = vunpack.c.l.b16 %v192
    %v635 = vunpack.c.h.b16 %v192
    %v636 = vunpack.c.l.b16 %v193
    %v637 = vunpack.c.h.b16 %v193
    %v638 = vunpack.c.l.b16 %v194
    %v639 = vunpack.c.h.b16 %v194
    %v640 = vunpack.c.l.b16 %v195
    %v641 = vunpack.c.h.b16 %v195
    %v642 = vunpack.c.l.b16 %v196
    %v643 = vunpack.c.h.b16 %v196
    %v644 = vunpack.c.l.b16 %v197
    %v645 = vunpack.c.h.b16 %v197
    %v646 = vunpack.c.l.b16 %v198
    %v647 = vunpack.c.h.b16 %v198
    %v648 = vunpack.c.l.b16 %v199
    %v649 = vunpack.c.h.b16 %v199
    %v650 = vunpack.c.l.b16 %v200
    %v651 = vunpack.c.h.b16 %v200
    %v652 = vunpack.c.l.b16 %v201
    %v653 = vunpack.c.h.b16 %v201
    %v654 = vunpack.c.l.b16 %v202
    %v655 = vunpack.c.h.b16 %v202
    %v656 = vunpack.c.l.b16 %v203
    %v657 = vunpack.c.h.b16 %v203
    %v658 = vunpack.c.l.b16 %v204
    %v659 = vunpack.c.h.b16 %v204
    %v660 = vunpack.c.l.b16 %v205
    %v661 = vunpack.c.h.b16 %v205
    %v662 = vunpack.c.l.b16 %v206
    %v663 = vunpack.c.h.b16 %v206
    %v664 = vunpack.c.l.b16 %v207
    %v665 = vunpack.c.h.b16 %v207
    %v666 = vunpack.c.l.b16 %v208
    %v667 = vunpack.c.h.b16 %v208
    %v668 = vunpack.c.l.b16 %v209
    %v669 = vunpack.c.h.b16 %v209
    %v670 = vunpack.c.l.b16 %v210
    %v671 = vunpack.c.h.b16 %v210
    %v672 = vunpack.c.l.b16 %v211
    %v673 = vunpack.c.h.b16 %v211
    %v674 = vunpack.c.l.b16 %v212
    %v675 = vunpack.c.h.b16 %v212
    %v676 = vunpack.c.l.b16 %v213
    %v677 = vunpack.c.h.b16 %v213
    %v678 = vunpack.c.l.b16 %v214
    %v679 = vunpack.c.h.b16 %v214
    %v680 = vunpack.c.l.b16 %v215
    %v681 = vunpack.c.h.b16 %v215
    %v682 = vunpack.c.l.b16 %v216
    %v683 = vunpack.c.h.b16 %v216
    %v684 = vunpack.c.l.b16 %v217
    %v685 = vunpack.c.h.b16 %v217
    %v686 = vunpack.c.l.b16 %v218
    %v687 = vunpack.c.h.b16 %v218
    %v688 = vunpack.c.l.b16 %v219
    %v689 = vunpack.c.h.b16 %v219
    %v690 = vunpack.c.l.b16 %v220
    %v691 = vunpack.c.h.b16 %v220
    %v692 = vunpack.c.l.b16 %v221
    %v693 = vunpack.c.h.b16 %v221
    %v694 = vunpack.c.l.b16 %v222
    %v695 = vunpack.c.h.b16 %v222
    %v696 = vunpack.c.l.b16 %v223
    %v697 = vunpack.c.h.b16 %v223
    %v698 = vunpack.c.l.b16 %v224
    %v699 = vunpack.c.h.b16 %v224
    %v700 = vunpack.c.l.b16 %v225
    %v701 = vunpack.c.h.b16 %v225
    %v702 = vunpack.c.l.b16 %v226
    %v703 = vunpack.c.h.b16 %v226
    %v704 = vunpack.c.l.b16 %v227
    %v705 = vunpack.c.h.b16 %v227
    %v706 = vunpack.c.l.b16 %v228
    %v707 = vunpack.c.h.b16 %v228
    %v708 = vunpack.c.l.b16 %v229
    %v709 = vunpack.c.h.b16 %v229
    %v710 = vunpack.c.l.b16 %v230
    %v711 = vunpack.c.h.b16 %v230
    %v712 = vunpack.c.l.b16 %v231
    %v713 = vunpack.c.h.b16 %v231
    %v714 = vunpack.c.l.b16 %v232
    %v715 = vunpack.c.h.b16 %v232
    %v716 = vunpack.c.l.b16 %v233
    %v717 = vunpack.c.h.b16 %v233
    %v718 = vunpack.c.l.b16 %v234
    %v719 = vunpack.c.h.b16 %v234
    %v720 = vunpack.c.l.b16 %v235
    %v721 = vunpack.c.h.b16 %v235
    %v722 = vunpack.c.l.b16 %v236
    %v723 = vunpack.c.h.b16 %v236
    %v724 = vunpack.c.l.b16 %v237
    %v725 = vunpack.c.h.b16 %v237
    %v726 = vunpack.c.l.b16 %v238
    %v727 = vunpack.c.h.b16 %v238
    %v728 = vunpack.c.l.b16 %v239
    %v729 = vunpack.c.h.b16 %v239
    %v730 = vunpack.c.l.b16 %v240
    %v731 = vunpack.c.h.b16 %v240
    %v732 = vunpack.c.l.b16 %v241
    %v733 = vunpack.c.h.b16 %v241
    %v734 = vunpack.c.l.b16 %v242
    %v735 = vunpack.c.h.b16 %v242
    %v736 = vunpack.c.l.b16 %v243
    %v737 = vunpack.c.h.b16 %v243
    %v738 = vunpack.c.l.b16 %v244
    %v739 = vunpack.c.h.b16 %v244
    %v740 = vunpack.c.l.b16 %v245
    %v741 = vunpack.c.h.b16 %v245
    %v742 = vunpack.c.l.b16 %v246
    %v743 = vunpack.c.h.b16 %v246
    %v744 = vunpack.c.l.b16 %v247
    %v745 = vunpack.c.h.b16 %v247
    %v746 = vpack.c.b16 %v450, %v442
    %v747 = vpack.c.b16 %v451, %v443
    %v748 = vpack.c.b16 %v452, %v444
    %v749 = vpack.c.b16 %v453, %v445
    %v750 = vpack.c.b16 %v454, %v446
    %v751 = vpack.c.b16 %v455, %v447
    %v752 = vpack.c.b16 %v456, %v448
    %v753 = vpack.c.b16 %v457, %v449
    %v754 = vpack.c.b16 %v466, %v458
    %v755 = vpack.c.b16 %v467, %v459
    %v756 = vpack.c.b16 %v468, %v460
    %v757 = vpack.c.b16 %v469, %v461
    %v758 = vpack.c.b16 %v470, %v462
    %v759 = vpack.c.b16 %v471, %v463
    %v760 = vpack.c.b16 %v472, %v464
    %v761 = vpack.c.b16 %v473, %v465
    %v762 = vpack.c.b16 %v482, %v474
    %v763 = vpack.c.b16 %v483, %v475
    %v764 = vpack.c.b16 %v484, %v476
    %v765 = vpack.c.b16 %v485, %v477
    %v766 = vpack.c.b16 %v486, %v478
    %v767 = vpack.c.b16 %v487, %v479
    %v768 = vpack.c.b16 %v488, %v480
    %v769 = vpack.c.b16 %v489, %v481
    %v770 = vpack.c.b16 %v498, %v490
    %v771 = vpack.c.b16 %v499, %v491
    %v772 = vpack.c.b16 %v500, %v492
    %v773 = vpack.c.b16 %v501, %v493
    %v774 = vpack.c.b16 %v502, %v494
    %v775 = vpack.c.b16 %v503, %v495
    %v776 = vpack.c.b16 %v504, %v496
    %v777 = vpack.c.b16 %v505, %v497
    %v778 = vpack.c.b16 %v514, %v506
    %v779 = vpack.c.b16 %v515, %v507
    %v780 = vpack.c.b16 %v516, %v508
    %v781 = vpack.c.b16 %v517, %v509
    %v782 = vpack.c.b16 %v518, %v510
    %v783 = vpack.c.b16 %v519, %v511
    %v784 = vpack.c.b16 %v520, %v512
    %v785 = vpack.c.b16 %v521, %v513
    %v786 = vpack.c.b16 %v530, %v522
    %v787 = vpack.c.b16 %v531, %v523
    %v788 = vpack.c.b16 %v532, %v524
    %v789 = vpack.c.b16 %v533, %v525
    %v790 = vpack.c.b16 %v534, %v526
    %v791 = vpack.c.b16 %v535, %v527
    %v792 = vpack.c.b16 %v536, %v528
    %v793 = vpack.c.b16 %v537, %v529
    %v794 = vpack.c.b16 %v546, %v538
    %v795 = vpack.c.b16 %v547, %v539
    %v796 = vpack.c.b16 %v548, %v540
    %v797 = vpack.c.b16 %v549, %v541
    %v798 = vpack.c.b16 %v550, %v542
    %v799 = vpack.c.b16 %v551, %v543
    %v800 = vpack.c.b16 %v552, %v544
    %v801 = vpack.c.b16 %v553, %v545
    %v802 = vpack.c.b16 %v562, %v554
    %v803 = vpack.c.b16 %v563, %v555
    %v804 = vpack.c.b16 %v564, %v556
    %v805 = vpack.c.b16 %v565, %v557
    %v806 = vpack.c.b16 %v566, %v558
    %v807 = vpack.c.b16 %v567, %v559
    %v808 = vpack.c.b16 %v568, %v560
    %v809 = vpack.c.b16 %v569, %v561
    %v810 = vpack.c.b16 %v578, %v570
    %v811 = vpack.c.b16 %v579, %v571
    %v812 = vpack.c.b16 %v580, %v572
    %v813 = vpack.c.b16 %v581, %v573
    %v814 = vpack.c.b16 %v582, %v574
    %v815 = vpack.c.b16 %v583, %v575
    %v816 = vpack.c.b16 %v584, %v576
    %v817 = vpack.c.b16 %v585, %v577
    %v818 = vpack.c.b16 %v594, %v586
    %v819 = vpack.c.b16 %v595, %v587
    %v820 = vpack.c.b16 %v596, %v588
    %v821 = vpack.c.b16 %v597, %v589
    %v822 = vpack.c.b16 %v598, %v590
    %v823 = vpack.c.b16 %v599, %v591
    %v824 = vpack.c.b16 %v600, %v592
    %v825 = vpack.c.b16 %v601, %v593
    %v826 = vpack.c.b16 %v610, %v602
    %v827 = vpack.c.b16 %v611, %v603
    %v828 = vpack.c.b16 %v612, %v604
    %v829 = vpack.c.b16 %v613, %v605
    %v830 = vpack.c.b16 %v614, %v606
    %v831 = vpack.c.b16 %v615, %v607
    %v832 = vpack.c.b16 %v616, %v608
    %v833 = vpack.c.b16 %v617, %v609
    %v834 = vpack.c.b16 %v626, %v618
    %v835 = vpack.c.b16 %v627, %v619
    %v836 = vpack.c.b16 %v628, %v620
    %v837 = vpack.c.b16 %v629, %v621
    %v838 = vpack.c.b16 %v630, %v622
    %v839 = vpack.c.b16 %v631, %v623
    %v840 = vpack.c.b16 %v632, %v624
    %v841 = vpack.c.b16 %v633, %v625
    %v842 = vpack.c.b16 %v642, %v634
    %v843 = vpack.c.b16 %v643, %v635
    %v844 = vpack.c.b16 %v644, %v636
    %v845 = vpack.c.b16 %v645, %v637
    %v846 = vpack.c.b16 %v646, %v638
    %v847 = vpack.c.b16 %v647, %v639
    %v848 = vpack.c.b16 %v648, %v640
    %v849 = vpack.c.b16 %v649, %v641
    %v850 = vpack.c.b16 %v658, %v650
    %v851 = vpack.c.b16 %v659, %v651
    %v852 = vpack.c.b16 %v660, %v652
    %v853 = vpack.c.b16 %v661, %v653
    %v854 = vpack.c.b16 %v662, %v654
    %v855 = vpack.c.b16 %v663, %v655
    %v856 = vpack.c.b16 %v664, %v656
    %v857 = vpack.c.b16 %v665, %v657
    %v858 = vpack.c.b16 %v674, %v666
    %v859 = vpack.c.b16 %v675, %v667
    %v860 = vpack.c.b16 %v676, %v668
    %v861 = vpack.c.b16 %v677, %v669
    %v862 = vpack.c.b16 %v678, %v670
    %v863 = vpack.c.b16 %v679, %v671
    %v864 = vpack.c.b16 %v680, %v672
    %v865 = vpack.c.b16 %v681, %v673
    %v866 = vpack.c.b16 %v690, %v682
    %v867 = vpack.c.b16 %v691, %v683
    %v868 = vpack.c.b16 %v692, %v684
    %v869 = vpack.c.b16 %v693, %v685
    %v870 = vpack.c.b16 %v694, %v686
    %v871 = vpack.c.b16 %v695, %v687
    %v872 = vpack.c.b16 %v696, %v688
    %v873 = vpack.c.b16 %v697, %v689
    %v874 = vpack.c.b16 %v706, %v698
    %v875 = vpack.c.b16 %v707, %v699
    %v876 = vpack.c.b16 %v708, %v700
    %v877 = vpack.c.b16 %v709, %v701
    %v878 = vpack.c.b16 %v710, %v702
    %v879 = vpack.c.b16 %v711, %v703
    %v880 = vpack.c.b16 %v712, %v704
    %v881 = vpack.c.b16 %v713, %v705
    %v882 = vpack.c.b16 %v722, %v714
    %v883 = vpack.c.b16 %v723, %v715
    %v884 = vpack.c.b16 %v724, %v716
    %v885 = vpack.c.b16 %v725, %v717
    %v886 = vpack.c.b16 %v726, %v718
    %v887 = vpack.c.b16 %v727, %v719
    %v888 = vpack.c.b16 %v728, %v720
    %v889 = vpack.c.b16 %v729, %v721
    %v890 = vpack.c.b16 %v738, %v730
    %v891 = vpack.c.b16 %v739, %v731
    %v892 = vpack.c.b16 %v740, %v732
    %v893 = vpack.c.b16 %v741, %v733
    %v894 = vpack.c.b16 %v742, %v734
    %v895 = vpack.c.b16 %v743, %v735
    %v896 = vpack.c.b16 %v744, %v736
    %v897 = vpack.c.b16 %v745, %v737
    %vm1042 = vcmask 359424
    %v1044 = vsel %vm1042, %v95, 0
    %vm1046 = vcmask 1045504
    %v1048 = vsel %vm1046, %v890, 0
    %v1051 = vsel %vm1046, %v891, 0
    %v1054 = vsel %vm1046, %v892, 0
    %v1057 = vsel %vm1046, %v893, 0
    %v1060 = vsel %vm1046, %v894, 0
    %v1063 = vsel %vm1046, %v895, 0
    %v1066 = vsel %vm1046, %v896, 0
    %v1069 = vsel %vm1046, %v897, 0
    %1071 = vmatprep.subr.bf16.mxu0 %v747
    %1072 = vmatpush1.bf16.msra.mxu0 %v746
    %1073 = vmatprep.subr.bf16.mxu0 %v755
    %1074 = vmatpush1.bf16.msra.mxu0 %v754
    %1075 = vmatprep.subr.bf16.mxu0 %v763
    %1076 = vmatpush1.bf16.msra.mxu0 %v762
    %1077 = vmatprep.subr.bf16.mxu0 %v771
    %1078 = vmatpush1.bf16.msra.mxu0 %v770
    %1079 = vmatprep.subr.bf16.mxu0 %v779
    %1080 = vmatpush1.bf16.msra.mxu0 %v778
    %1081 = vmatprep.subr.bf16.mxu0 %v787
    %1082 = vmatpush1.bf16.msra.mxu0 %v786
    %1083 = vmatprep.subr.bf16.mxu0 %v795
    %1084 = vmatpush1.bf16.msra.mxu0 %v794
    %1085 = vmatprep.subr.bf16.mxu0 %v803
    %1086 = vmatpush1.bf16.msra.mxu0 %v802
    %1087 = vmatprep.subr.bf16.mxu0 %v811
    %1088 = vmatpush1.bf16.msra.mxu0 %v810
    %1089 = vmatprep.subr.bf16.mxu0 %v819
    %1090 = vmatpush1.bf16.msra.mxu0 %v818
    %1091 = vmatprep.subr.bf16.mxu0 %v827
    %1092 = vmatpush1.bf16.msra.mxu0 %v826
    %1093 = vmatprep.subr.bf16.mxu0 %v835
    %1094 = vmatpush1.bf16.msra.mxu0 %v834
    %1095 = vmatprep.subr.bf16.mxu0 %v843
    %1096 = vmatpush1.bf16.msra.mxu0 %v842
    %1097 = vmatprep.subr.bf16.mxu0 %v851
    %1098 = vmatpush1.bf16.msra.mxu0 %v850
    %1099 = vmatprep.subr.bf16.mxu0 %v859
    %1100 = vmatpush1.bf16.msra.mxu0 %v858
    %1101 = vmatprep.subr.bf16.mxu0 %v867
    %1102 = vmatpush1.bf16.msra.mxu0 %v866
    %1103 = vmatprep.mubr.bf16.mxu0 %v94
    %1104 = vmatmul.mubr.bf16.gmra.mrb[0].mxu0 %v93
    %v1105 = vpop.f32.mrb[0].mxu0
    %v1106 = vadd.f32 %v253, %v1105
    %v1107 = vpop.f32.mrb[0].mxu0
    %v1108 = vadd.f32 %v257, %v1107
    %v1109 = vpop.f32.mrb[0].mxu0
    %v1110 = vpop.f32.mrb[0].mxu0
    %1111 = vdwg.mxu0
    %1112 = vmatprep.subr.bf16.mxu0 %v875
    %1113 = vmatpush1.bf16.msra.mxu0 %v874
    %1114 = vmatprep.subr.bf16.mxu0 %v883
    %1115 = vmatpush1.bf16.msra.mxu0 %v882
    %1116 = vmatprep.subr.bf16.mxu0 %v1051
    %1117 = vmatpush1.bf16.msra.mxu0 %v1048
    %1118 = vmatprep.subr.bf16.mxu0 0
    %1119 = vmatpush1.bf16.msra.mxu0 0
    %1120 = vmatprep.subr.bf16.mxu0 0
    %1121 = vmatpush1.bf16.msra.mxu0 0
    %1122 = vmatprep.subr.bf16.mxu0 0
    %1123 = vmatpush1.bf16.msra.mxu0 0
    %1124 = vmatprep.subr.bf16.mxu0 0
    %1125 = vmatpush1.bf16.msra.mxu0 0
    %1126 = vmatprep.subr.bf16.mxu0 0
    %1127 = vmatpush1.bf16.msra.mxu0 0
    %1128 = vmatprep.subr.bf16.mxu0 0
    %1129 = vmatpush1.bf16.msra.mxu0 0
    %1130 = vmatprep.subr.bf16.mxu0 0
    %1131 = vmatpush1.bf16.msra.mxu0 0
    %1132 = vmatprep.subr.bf16.mxu0 0
    %1133 = vmatpush1.bf16.msra.mxu0 0
    %1134 = vmatprep.subr.bf16.mxu0 0
    %1135 = vmatpush1.bf16.msra.mxu0 0
    %1136 = vmatprep.subr.bf16.mxu0 0
    %1137 = vmatpush1.bf16.msra.mxu0 0
    %1138 = vmatprep.subr.bf16.mxu0 0
    %1139 = vmatpush1.bf16.msra.mxu0 0
    %1140 = vmatprep.subr.bf16.mxu0 0
    %1141 = vmatpush1.bf16.msra.mxu0 0
    %1142 = vmatprep.subr.bf16.mxu0 0
    %1143 = vmatpush1.bf16.msra.mxu0 0
    %1144 = vmatprep.mubr.bf16.mxu0 0
    %1145 = vmatmul.mubr.bf16.gmra.mrb[0].mxu0 %v1044
    %v1146 = vpop.f32.mrb[0].mxu0
    %v1147 = vadd.f32 %v1106, %v1146
    %v1148 = vpop.f32.mrb[0].mxu0
    %v1149 = vadd.f32 %v1108, %v1148
    %v1150 = vpop.f32.mrb[0].mxu0
    %v1151 = vpop.f32.mrb[0].mxu0
    %1152 = vdwg.mxu0
    %1153 = vmatprep.subr.bf16.mxu0 %v749
    %1154 = vmatpush1.bf16.msra.mxu0 %v748
    %1155 = vmatprep.subr.bf16.mxu0 %v757
    %1156 = vmatpush1.bf16.msra.mxu0 %v756
    %1157 = vmatprep.subr.bf16.mxu0 %v765
    %1158 = vmatpush1.bf16.msra.mxu0 %v764
    %1159 = vmatprep.subr.bf16.mxu0 %v773
    %1160 = vmatpush1.bf16.msra.mxu0 %v772
    %1161 = vmatprep.subr.bf16.mxu0 %v781
    %1162 = vmatpush1.bf16.msra.mxu0 %v780
    %1163 = vmatprep.subr.bf16.mxu0 %v789
    %1164 = vmatpush1.bf16.msra.mxu0 %v788
    %1165 = vmatprep.subr.bf16.mxu0 %v797
    %1166 = vmatpush1.bf16.msra.mxu0 %v796
    %1167 = vmatprep.subr.bf16.mxu0 %v805
    %1168 = vmatpush1.bf16.msra.mxu0 %v804
    %1169 = vmatprep.subr.bf16.mxu0 %v813
    %1170 = vmatpush1.bf16.msra.mxu0 %v812
    %1171 = vmatprep.subr.bf16.mxu0 %v821
    %1172 = vmatpush1.bf16.msra.mxu0 %v820
    %1173 = vmatprep.subr.bf16.mxu0 %v829
    %1174 = vmatpush1.bf16.msra.mxu0 %v828
    %1175 = vmatprep.subr.bf16.mxu0 %v837
    %1176 = vmatpush1.bf16.msra.mxu0 %v836
    %1177 = vmatprep.subr.bf16.mxu0 %v845
    %1178 = vmatpush1.bf16.msra.mxu0 %v844
    %1179 = vmatprep.subr.bf16.mxu0 %v853
    %1180 = vmatpush1.bf16.msra.mxu0 %v852
    %1181 = vmatprep.subr.bf16.mxu0 %v861
    %1182 = vmatpush1.bf16.msra.mxu0 %v860
    %1183 = vmatprep.subr.bf16.mxu0 %v869
    %1184 = vmatpush1.bf16.msra.mxu0 %v868
    %1185 = vmatprep.mubr.bf16.mxu0 %v94
    %1186 = vmatmul.mubr.bf16.gmra.mrb[0].mxu0 %v93
    %v1187 = vpop.f32.mrb[0].mxu0
    %v1188 = vadd.f32 %v261, %v1187
    %v1189 = vpop.f32.mrb[0].mxu0
    %v1190 = vadd.f32 %v265, %v1189
    %v1191 = vpop.f32.mrb[0].mxu0
    %v1192 = vpop.f32.mrb[0].mxu0
    %1193 = vdwg.mxu0
    %1194 = vmatprep.subr.bf16.mxu0 %v877
    %1195 = vmatpush1.bf16.msra.mxu0 %v876
    %1196 = vmatprep.subr.bf16.mxu0 %v885
    %1197 = vmatpush1.bf16.msra.mxu0 %v884
    %1198 = vmatprep.subr.bf16.mxu0 %v1057
    %1199 = vmatpush1.bf16.msra.mxu0 %v1054
    %1200 = vmatprep.subr.bf16.mxu0 0
    %1201 = vmatpush1.bf16.msra.mxu0 0
    %1202 = vmatprep.subr.bf16.mxu0 0
    %1203 = vmatpush1.bf16.msra.mxu0 0
    %1204 = vmatprep.subr.bf16.mxu0 0
    %1205 = vmatpush1.bf16.msra.mxu0 0
    %1206 = vmatprep.subr.bf16.mxu0 0
    %1207 = vmatpush1.bf16.msra.mxu0 0
    %1208 = vmatprep.subr.bf16.mxu0 0
    %1209 = vmatpush1.bf16.msra.mxu0 0
    %1210 = vmatprep.subr.bf16.mxu0 0
    %1211 = vmatpush1.bf16.msra.mxu0 0
    %1212 = vmatprep.subr.bf16.mxu0 0
    %1213 = vmatpush1.bf16.msra.mxu0 0
    %1214 = vmatprep.subr.bf16.mxu0 0
    %1215 = vmatpush1.bf16.msra.mxu0 0
    %1216 = vmatprep.subr.bf16.mxu0 0
    %1217 = vmatpush1.bf16.msra.mxu0 0
    %1218 = vmatprep.subr.bf16.mxu0 0
    %1219 = vmatpush1.bf16.msra.mxu0 0
    %1220 = vmatprep.subr.bf16.mxu0 0
    %1221 = vmatpush1.bf16.msra.mxu0 0
    %1222 = vmatprep.subr.bf16.mxu0 0
    %1223 = vmatpush1.bf16.msra.mxu0 0
    %1224 = vmatprep.subr.bf16.mxu0 0
    %1225 = vmatpush1.bf16.msra.mxu0 0
    %1226 = vmatprep.mubr.bf16.mxu0 0
    %1227 = vmatmul.mubr.bf16.gmra.mrb[0].mxu0 %v1044
    %v1228 = vpop.f32.mrb[0].mxu0
    %v1229 = vadd.f32 %v1188, %v1228
    %v1230 = vpop.f32.mrb[0].mxu0
    %v1231 = vadd.f32 %v1190, %v1230
    %v1232 = vpop.f32.mrb[0].mxu0
    %v1233 = vpop.f32.mrb[0].mxu0
    %1234 = vdwg.mxu0
    %1235 = vmatprep.subr.bf16.mxu0 %v751
    %1236 = vmatpush1.bf16.msra.mxu0 %v750
    %1237 = vmatprep.subr.bf16.mxu0 %v759
    %1238 = vmatpush1.bf16.msra.mxu0 %v758
    %1239 = vmatprep.subr.bf16.mxu0 %v767
    %1240 = vmatpush1.bf16.msra.mxu0 %v766
    %1241 = vmatprep.subr.bf16.mxu0 %v775
    %1242 = vmatpush1.bf16.msra.mxu0 %v774
    %1243 = vmatprep.subr.bf16.mxu0 %v783
    %1244 = vmatpush1.bf16.msra.mxu0 %v782
    %1245 = vmatprep.subr.bf16.mxu0 %v791
    %1246 = vmatpush1.bf16.msra.mxu0 %v790
    %1247 = vmatprep.subr.bf16.mxu0 %v799
    %1248 = vmatpush1.bf16.msra.mxu0 %v798
    %1249 = vmatprep.subr.bf16.mxu0 %v807
    %1250 = vmatpush1.bf16.msra.mxu0 %v806
    %1251 = vmatprep.subr.bf16.mxu0 %v815
    %1252 = vmatpush1.bf16.msra.mxu0 %v814
    %1253 = vmatprep.subr.bf16.mxu0 %v823
    %1254 = vmatpush1.bf16.msra.mxu0 %v822
    %1255 = vmatprep.subr.bf16.mxu0 %v831
    %1256 = vmatpush1.bf16.msra.mxu0 %v830
    %1257 = vmatprep.subr.bf16.mxu0 %v839
    %1258 = vmatpush1.bf16.msra.mxu0 %v838
    %1259 = vmatprep.subr.bf16.mxu0 %v847
    %1260 = vmatpush1.bf16.msra.mxu0 %v846
    %1261 = vmatprep.subr.bf16.mxu0 %v855
    %1262 = vmatpush1.bf16.msra.mxu0 %v854
    %1263 = vmatprep.subr.bf16.mxu0 %v863
    %1264 = vmatpush1.bf16.msra.mxu0 %v862
    %1265 = vmatprep.subr.bf16.mxu0 %v871
    %1266 = vmatpush1.bf16.msra.mxu0 %v870
    %1267 = vmatprep.mubr.bf16.mxu0 %v94
    %1268 = vmatmul.mubr.bf16.gmra.mrb[0].mxu0 %v93
    %v1269 = vpop.f32.mrb[0].mxu0
    %v1270 = vadd.f32 %v269, %v1269
    %v1271 = vpop.f32.mrb[0].mxu0
    %v1272 = vadd.f32 %v273, %v1271
    %v1273 = vpop.f32.mrb[0].mxu0
    %v1274 = vpop.f32.mrb[0].mxu0
    %1275 = vdwg.mxu0
    %1276 = vmatprep.subr.bf16.mxu0 %v879
    %1277 = vmatpush1.bf16.msra.mxu0 %v878
    %1278 = vmatprep.subr.bf16.mxu0 %v887
    %1279 = vmatpush1.bf16.msra.mxu0 %v886
    %1280 = vmatprep.subr.bf16.mxu0 %v1063
    %1281 = vmatpush1.bf16.msra.mxu0 %v1060
    %1282 = vmatprep.subr.bf16.mxu0 0
    %1283 = vmatpush1.bf16.msra.mxu0 0
    %1284 = vmatprep.subr.bf16.mxu0 0
    %1285 = vmatpush1.bf16.msra.mxu0 0
    %1286 = vmatprep.subr.bf16.mxu0 0
    %1287 = vmatpush1.bf16.msra.mxu0 0
    %1288 = vmatprep.subr.bf16.mxu0 0
    %1289 = vmatpush1.bf16.msra.mxu0 0
    %1290 = vmatprep.subr.bf16.mxu0 0
    %1291 = vmatpush1.bf16.msra.mxu0 0
    %1292 = vmatprep.subr.bf16.mxu0 0
    %1293 = vmatpush1.bf16.msra.mxu0 0
    %1294 = vmatprep.subr.bf16.mxu0 0
    %1295 = vmatpush1.bf16.msra.mxu0 0
    %1296 = vmatprep.subr.bf16.mxu0 0
    %1297 = vmatpush1.bf16.msra.mxu0 0
    %1298 = vmatprep.subr.bf16.mxu0 0
    %1299 = vmatpush1.bf16.msra.mxu0 0
    %1300 = vmatprep.subr.bf16.mxu0 0
    %1301 = vmatpush1.bf16.msra.mxu0 0
    %1302 = vmatprep.subr.bf16.mxu0 0
    %1303 = vmatpush1.bf16.msra.mxu0 0
    %1304 = vmatprep.subr.bf16.mxu0 0
    %1305 = vmatpush1.bf16.msra.mxu0 0
    %1306 = vmatprep.subr.bf16.mxu0 0
    %1307 = vmatpush1.bf16.msra.mxu0 0
    %1308 = vmatprep.mubr.bf16.mxu0 0
    %1309 = vmatmul.mubr.bf16.gmra.mrb[0].mxu0 %v1044
    %v1310 = vpop.f32.mrb[0].mxu0
    %v1311 = vadd.f32 %v1270, %v1310
    %v1312 = vpop.f32.mrb[0].mxu0
    %v1313 = vadd.f32 %v1272, %v1312
    %v1314 = vpop.f32.mrb[0].mxu0
    %v1315 = vpop.f32.mrb[0].mxu0
    %1316 = vdwg.mxu0
    %1317 = vmatprep.subr.bf16.mxu0 %v753
    %1318 = vmatpush1.bf16.msra.mxu0 %v752
    %1319 = vmatprep.subr.bf16.mxu0 %v761
    %1320 = vmatpush1.bf16.msra.mxu0 %v760
    %1321 = vmatprep.subr.bf16.mxu0 %v769
    %1322 = vmatpush1.bf16.msra.mxu0 %v768
    %1323 = vmatprep.subr.bf16.mxu0 %v777
    %1324 = vmatpush1.bf16.msra.mxu0 %v776
    %1325 = vmatprep.subr.bf16.mxu0 %v785
    %1326 = vmatpush1.bf16.msra.mxu0 %v784
    %1327 = vmatprep.subr.bf16.mxu0 %v793
    %1328 = vmatpush1.bf16.msra.mxu0 %v792
    %1329 = vmatprep.subr.bf16.mxu0 %v801
    %1330 = vmatpush1.bf16.msra.mxu0 %v800
    %1331 = vmatprep.subr.bf16.mxu0 %v809
    %1332 = vmatpush1.bf16.msra.mxu0 %v808
    %1333 = vmatprep.subr.bf16.mxu0 %v817
    %1334 = vmatpush1.bf16.msra.mxu0 %v816
    %1335 = vmatprep.subr.bf16.mxu0 %v825
    %1336 = vmatpush1.bf16.msra.mxu0 %v824
    %1337 = vmatprep.subr.bf16.mxu0 %v833
    %1338 = vmatpush1.bf16.msra.mxu0 %v832
    %1339 = vmatprep.subr.bf16.mxu0 %v841
    %1340 = vmatpush1.bf16.msra.mxu0 %v840
    %1341 = vmatprep.subr.bf16.mxu0 %v849
    %1342 = vmatpush1.bf16.msra.mxu0 %v848
    %1343 = vmatprep.subr.bf16.mxu0 %v857
    %1344 = vmatpush1.bf16.msra.mxu0 %v856
    %1345 = vmatprep.subr.bf16.mxu0 %v865
    %1346 = vmatpush1.bf16.msra.mxu0 %v864
    %1347 = vmatprep.subr.bf16.mxu0 %v873
    %1348 = vmatpush1.bf16.msra.mxu0 %v872
    %1349 = vmatprep.mubr.bf16.mxu0 %v94
    %1350 = vmatmul.mubr.bf16.gmra.mrb[0].mxu0 %v93
    %v1351 = vpop.f32.mrb[0].mxu0
    %v1352 = vadd.f32 %v277, %v1351
    %v1353 = vpop.f32.mrb[0].mxu0
    %v1354 = vadd.f32 %v281, %v1353
    %v1355 = vpop.f32.mrb[0].mxu0
    %v1356 = vpop.f32.mrb[0].mxu0
    %1357 = vdwg.mxu0
    %1358 = vmatprep.subr.bf16.mxu0 %v881
    %1359 = vmatpush1.bf16.msra.mxu0 %v880
    %1360 = vmatprep.subr.bf16.mxu0 %v889
    %1361 = vmatpush1.bf16.msra.mxu0 %v888
    %1362 = vmatprep.subr.bf16.mxu0 %v1069
    %1363 = vmatpush1.bf16.msra.mxu0 %v1066
    %1364 = vmatprep.subr.bf16.mxu0 0
    %1365 = vmatpush1.bf16.msra.mxu0 0
    %1366 = vmatprep.subr.bf16.mxu0 0
    %1367 = vmatpush1.bf16.msra.mxu0 0
    %1368 = vmatprep.subr.bf16.mxu0 0
    %1369 = vmatpush1.bf16.msra.mxu0 0
    %1370 = vmatprep.subr.bf16.mxu0 0
    %1371 = vmatpush1.bf16.msra.mxu0 0
    %1372 = vmatprep.subr.bf16.mxu0 0
    %1373 = vmatpush1.bf16.msra.mxu0 0
    %1374 = vmatprep.subr.bf16.mxu0 0
    %1375 = vmatpush1.bf16.msra.mxu0 0
    %1376 = vmatprep.subr.bf16.mxu0 0
    %1377 = vmatpush1.bf16.msra.mxu0 0
    %1378 = vmatprep.subr.bf16.mxu0 0
    %1379 = vmatpush1.bf16.msra.mxu0 0
    %1380 = vmatprep.subr.bf16.mxu0 0
    %1381 = vmatpush1.bf16.msra.mxu0 0
    %1382 = vmatprep.subr.bf16.mxu0 0
    %1383 = vmatpush1.bf16.msra.mxu0 0
    %1384 = vmatprep.subr.bf16.mxu0 0
    %1385 = vmatpush1.bf16.msra.mxu0 0
    %1386 = vmatprep.subr.bf16.mxu0 0
    %1387 = vmatpush1.bf16.msra.mxu0 0
    %1388 = vmatprep.subr.bf16.mxu0 0
    %1389 = vmatpush1.bf16.msra.mxu0 0
    %1390 = vmatprep.mubr.bf16.mxu0 0
    %1391 = vmatmul.mubr.bf16.gmra.mrb[0].mxu0 %v1044
    %v1392 = vpop.f32.mrb[0].mxu0
    %v1393 = vadd.f32 %v1352, %v1392
    %v1394 = vpop.f32.mrb[0].mxu0
    %v1395 = vadd.f32 %v1354, %v1394
    %v1396 = vpop.f32.mrb[0].mxu0
    %v1397 = vpop.f32.mrb[0].mxu0
    %1398 = vdwg.mxu0
    %vm1399 = vcmp.gt.f32.partialorder %v1147, 0.0
    %vm1400 = vcmp.gt.f32.partialorder %v1149, 0.0
    %vm1401 = vcmp.gt.f32.partialorder %v1229, 0.0
    %vm1402 = vcmp.gt.f32.partialorder %v1231, 0.0
    %vm1403 = vcmp.gt.f32.partialorder %v1311, 0.0
    %vm1404 = vcmp.gt.f32.partialorder %v1313, 0.0
    %vm1405 = vcmp.gt.f32.partialorder %v1393, 0.0
    %vm1406 = vcmp.gt.f32.partialorder %v1395, 0.0
    %v1407 = vmul.f32 %v1147, 0.1
    %v1408 = vmul.f32 %v1149, 0.1
    %v1409 = vmul.f32 %v1229, 0.1
    %v1410 = vmul.f32 %v1231, 0.1
    %v1411 = vmul.f32 %v1311, 0.1
    %v1412 = vmul.f32 %v1313, 0.1
    %v1413 = vmul.f32 %v1393, 0.1
    %v1414 = vmul.f32 %v1395, 0.1
    %v1415 = vsel %vm1399, %v1147, %v1407
    %v1416 = vsel %vm1400, %v1149, %v1408
    %v1417 = vsel %vm1401, %v1229, %v1409
    %v1418 = vsel %vm1402, %v1231, %v1410
    %v1419 = vsel %vm1403, %v1311, %v1411
    %v1420 = vsel %vm1404, %v1313, %v1412
    %v1421 = vsel %vm1405, %v1393, %v1413
    %v1422 = vsel %vm1406, %v1395, %v1414
    %v1423 = vpack.c.bf16 %v1415, %v1415
    %v1424 = vpack.c.bf16 %v1416, %v1416
    %v1425 = vpack.c.bf16 %v1417, %v1417
    %v1426 = vpack.c.bf16 %v1418, %v1418
    %v1427 = vpack.c.bf16 %v1419, %v1419
    %v1428 = vpack.c.bf16 %v1420, %v1420
    %v1429 = vpack.c.bf16 %v1421, %v1421
    %v1430 = vpack.c.bf16 %v1422, %v1422
    %v1431 = vld [vmem:[#allocation6] sm:$0xf]
    %v1432 = vld [vmem:[#allocation6 + $0x4] sm:$0xf]
    %v1433 = vld [vmem:[#allocation6 + $0x8] sm:$0xf]
    %v1434 = vld [vmem:[#allocation6 + $0xc] sm:$0xf]
    %v1435 = vld [vmem:[#allocation6 + $0x10] sm:$0xf]
    %v1436 = vld [vmem:[#allocation6 + $0x14] sm:$0xf]
    %v1437 = vld [vmem:[#allocation6 + $0x18] sm:$0xf]
    %v1438 = vld [vmem:[#allocation6 + $0x1c] sm:$0xf]
    %v1439 = vld [vmem:[#allocation6 + $0x20] sm:$0xf]
    %v1440 = vld [vmem:[#allocation6 + $0x24] sm:$0xf]
    %v1441 = vld [vmem:[#allocation6 + $0x28] sm:$0xf]
    %v1442 = vld [vmem:[#allocation6 + $0x2c] sm:$0xf]
    %v1443 = vld [vmem:[#allocation6 + $0x30] sm:$0xf]
    %v1444 = vld [vmem:[#allocation6 + $0x34] sm:$0xf]
    %v1445 = vld [vmem:[#allocation6 + $0x38] sm:$0xf]
    %v1446 = vld [vmem:[#allocation6 + $0x3c] sm:$0xf]
    %v1447 = vld [vmem:[#allocation6 + $0x40] sm:$0xf]
    %v1448 = vld [vmem:[#allocation6 + $0x44] sm:$0xf]
    %v1449 = vld [vmem:[#allocation6 + $0x48] sm:$0xf]
    %v1450 = vld [vmem:[#allocation6 + $0x4c] sm:$0xf]
    %v1451 = vld [vmem:[#allocation6 + $0x50] sm:$0xf]
    %v1452 = vld [vmem:[#allocation6 + $0x54] sm:$0xf]
    %v1453 = vld [vmem:[#allocation6 + $0x58] sm:$0xf]
    %v1454 = vld [vmem:[#allocation6 + $0x5c] sm:$0xf]
    %v1455 = vld [vmem:[#allocation6 + $0x60] sm:$0xf]
    %v1456 = vld [vmem:[#allocation6 + $0x64] sm:$0xf]
    %v1457 = vld [vmem:[#allocation6 + $0x68] sm:$0xf]
    %v1458 = vld [vmem:[#allocation6 + $0x6c] sm:$0xf]
    %v1459 = vld [vmem:[#allocation6 + $0x70] sm:$0xf]
    %v1460 = vld [vmem:[#allocation6 + $0x74] sm:$0xf]
    %v1461 = vld [vmem:[#allocation6 + $0x78] sm:$0xf]
    %v1462 = vld [vmem:[#allocation6 + $0x7c] sm:$0xf]
    %v1463 = vld [vmem:[#allocation6 + $0x80] sm:$0xf]
    %v1464 = vld [vmem:[#allocation6 + $0x84] sm:$0xf]
    %v1465 = vld [vmem:[#allocation6 + $0x88] sm:$0xf]
    %v1466 = vld [vmem:[#allocation6 + $0x8c] sm:$0xf]
    %v1467 = vld [vmem:[#allocation6 + $0x90] sm:$0xf]
    %v1468 = vld [vmem:[#allocation6 + $0x94] sm:$0xf]
    %v1469 = vld [vmem:[#allocation6 + $0x98] sm:$0xf]
    %v1470 = vld [vmem:[#allocation6 + $0x9c] sm:$0xf]
    %v1471 = vld [vmem:[#allocation6 + $0xa0] sm:$0xf]
    %v1472 = vld [vmem:[#allocation6 + $0xa4] sm:$0xf]
    %v1473 = vld [vmem:[#allocation6 + $0xa8] sm:$0xf]
    %v1474 = vld [vmem:[#allocation6 + $0xac] sm:$0xf]
    %v1475 = vld [vmem:[#allocation6 + $0xb0] sm:$0xf]
    %v1476 = vld [vmem:[#allocation6 + $0xb4] sm:$0xf]
    %v1477 = vld [vmem:[#allocation6 + $0xb8] sm:$0xf]
    %v1478 = vld [vmem:[#allocation6 + $0xbc] sm:$0xf]
    %v1479 = vld [vmem:[#allocation6 + $0xc0] sm:$0xf]
    %v1480 = vld [vmem:[#allocation6 + $0xc4] sm:$0xf]
    %v1481 = vld [vmem:[#allocation6 + $0xc8] sm:$0xf]
    %v1482 = vld [vmem:[#allocation6 + $0xcc] sm:$0xf]
    %v1483 = vld [vmem:[#allocation6 + $0xd0] sm:$0xf]
    %v1484 = vld [vmem:[#allocation6 + $0xd4] sm:$0xf]
    %v1485 = vld [vmem:[#allocation6 + $0xd8] sm:$0xf]
    %v1486 = vld [vmem:[#allocation6 + $0xdc] sm:$0xf]
    %v1487 = vld [vmem:[#allocation6 + $0xe0] sm:$0xf]
    %v1488 = vld [vmem:[#allocation6 + $0xe4] sm:$0xf]
    %v1489 = vld [vmem:[#allocation6 + $0xe8] sm:$0xf]
    %v1490 = vld [vmem:[#allocation6 + $0xec] sm:$0xf]
    %v1491 = vld [vmem:[#allocation6 + $0xf0] sm:$0xf]
    %v1492 = vld [vmem:[#allocation6 + $0xf4] sm:$0xf]
    %v1493 = vld [vmem:[#allocation6 + $0xf8] sm:$0xf]
    %v1494 = vld [vmem:[#allocation6 + $0xfc] sm:$0xf]
    %v1495 = vld [vmem:[#allocation6 + $0x100] sm:$0xf]
    %v1496 = vld [vmem:[#allocation6 + $0x104] sm:$0xf]
    %v1497 = vld [vmem:[#allocation6 + $0x108] sm:$0xf]
    %v1498 = vld [vmem:[#allocation6 + $0x10c] sm:$0xf]
    %v1499 = vld [vmem:[#allocation6 + $0x110] sm:$0xf]
    %v1500 = vld [vmem:[#allocation6 + $0x114] sm:$0xf]
    %v1501 = vld [vmem:[#allocation6 + $0x118] sm:$0xf]
    %v1502 = vld [vmem:[#allocation6 + $0x11c] sm:$0xf]
    %v1503 = vld [vmem:[#allocation6 + $0x120] sm:$0xf]
    %v1504 = vld [vmem:[#allocation6 + $0x124] sm:$0xf]
    %v1505 = vld [vmem:[#allocation6 + $0x128] sm:$0xf]
    %v1506 = vld [vmem:[#allocation6 + $0x12c] sm:$0xf]
    %v1507 = vld [vmem:[#allocation6 + $0x130] sm:$0xf]
    %v1508 = vld [vmem:[#allocation6 + $0x134] sm:$0xf]
    %v1509 = vld [vmem:[#allocation6 + $0x138] sm:$0xf]
    %v1510 = vld [vmem:[#allocation6 + $0x13c] sm:$0xf]
    %v1511 = vld [vmem:[#allocation6 + $0x140] sm:$0xf]
    %v1512 = vld [vmem:[#allocation6 + $0x144] sm:$0xf]
    %v1513 = vld [vmem:[#allocation6 + $0x148] sm:$0xf]
    %v1514 = vld [vmem:[#allocation6 + $0x14c] sm:$0xf]
    %v1515 = vld [vmem:[#allocation6 + $0x150] sm:$0xf]
    %v1516 = vld [vmem:[#allocation6 + $0x154] sm:$0xf]
    %v1517 = vld [vmem:[#allocation6 + $0x158] sm:$0xf]
    %v1518 = vld [vmem:[#allocation6 + $0x15c] sm:$0xf]
    %v1519 = vld [vmem:[#allocation6 + $0x160] sm:$0xf]
    %v1520 = vld [vmem:[#allocation6 + $0x164] sm:$0xf]
    %v1521 = vld [vmem:[#allocation6 + $0x168] sm:$0xf]
    %v1522 = vld [vmem:[#allocation6 + $0x16c] sm:$0xf]
    %v1523 = vld [vmem:[#allocation6 + $0x170] sm:$0xf]
    %v1524 = vld [vmem:[#allocation6 + $0x174] sm:$0xf]
    %v1525 = vld [vmem:[#allocation6 + $0x178] sm:$0xf]
    %v1526 = vld [vmem:[#allocation6 + $0x17c] sm:$0xf]
    %v1527 = vld [vmem:[#allocation6 + $0x180] sm:$0xf]
    %v1528 = vld [vmem:[#allocation6 + $0x184] sm:$0xf]
    %v1529 = vld [vmem:[#allocation6 + $0x188] sm:$0xf]
    %v1530 = vld [vmem:[#allocation6 + $0x18c] sm:$0xf]
    %v1531 = vld [vmem:[#allocation6 + $0x190] sm:$0xf]
    %v1532 = vld [vmem:[#allocation6 + $0x194] sm:$0xf]
    %v1533 = vld [vmem:[#allocation6 + $0x198] sm:$0xf]
    %v1534 = vld [vmem:[#allocation6 + $0x19c] sm:$0xf]
    %v1535 = vld [vmem:[#allocation6 + $0x1a0] sm:$0xf]
    %v1536 = vld [vmem:[#allocation6 + $0x1a4] sm:$0xf]
    %v1537 = vld [vmem:[#allocation6 + $0x1a8] sm:$0xf]
    %v1538 = vld [vmem:[#allocation6 + $0x1ac] sm:$0xf]
    %v1539 = vld [vmem:[#allocation6 + $0x1b0] sm:$0xf]
    %v1540 = vld [vmem:[#allocation6 + $0x1b4] sm:$0xf]
    %v1541 = vld [vmem:[#allocation6 + $0x1b8] sm:$0xf]
    %v1542 = vld [vmem:[#allocation6 + $0x1bc] sm:$0xf]
    %v1543 = vld [vmem:[#allocation6 + $0x1c0] sm:$0xf]
    %v1544 = vld [vmem:[#allocation6 + $0x1c4] sm:$0xf]
    %v1545 = vld [vmem:[#allocation6 + $0x1c8] sm:$0xf]
    %v1546 = vld [vmem:[#allocation6 + $0x1cc] sm:$0xf]
    %v1547 = vld [vmem:[#allocation6 + $0x1d0] sm:$0xf]
    %v1548 = vld [vmem:[#allocation6 + $0x1d4] sm:$0xf]
    %v1549 = vld [vmem:[#allocation6 + $0x1d8] sm:$0xf]
    %v1550 = vld [vmem:[#allocation6 + $0x1dc] sm:$0xf]
    %v1551 = vld [vmem:[#allocation6 + $0x1e0] sm:$0xf]
    %v1552 = vld [vmem:[#allocation6 + $0x1e4] sm:$0xf]
    %v1553 = vld [vmem:[#allocation6 + $0x1e8] sm:$0xf]
    %v1554 = vld [vmem:[#allocation6 + $0x1ec] sm:$0xf]
    %v1555 = vld [vmem:[#allocation6 + $0x1f0] sm:$0xf]
    %v1556 = vld [vmem:[#allocation6 + $0x1f4] sm:$0xf]
    %v1557 = vld [vmem:[#allocation6 + $0x1f8] sm:$0xf]
    %v1558 = vld [vmem:[#allocation6 + $0x1fc] sm:$0xf]
    %v1559 = vld [vmem:[%s5] sm:$0x1]
    %v1561 = vlaneseq
    %v1562 = vshrl.u32 %v1561, 7
    %v1563 = vsub.s32 0, %v1562
    %v1564 = vrot.slane %v1559, %v1563
    %v1694 = vunpack.c.l.b16 %v1431
    %v1695 = vunpack.c.l.b16 %v1432
    %v1696 = vunpack.c.l.b16 %v1433
    %v1697 = vunpack.c.l.b16 %v1434
    %v1698 = vunpack.c.l.b16 %v1435
    %v1699 = vunpack.c.l.b16 %v1436
    %v1700 = vunpack.c.l.b16 %v1437
    %v1701 = vunpack.c.l.b16 %v1438
    %v1702 = vunpack.c.l.b16 %v1439
    %v1703 = vunpack.c.l.b16 %v1440
    %v1704 = vunpack.c.l.b16 %v1441
    %v1705 = vunpack.c.l.b16 %v1442
    %v1706 = vunpack.c.l.b16 %v1443
    %v1707 = vunpack.c.l.b16 %v1444
    %v1708 = vunpack.c.l.b16 %v1445
    %v1709 = vunpack.c.l.b16 %v1446
    %v1710 = vunpack.c.l.b16 %v1447
    %v1711 = vunpack.c.l.b16 %v1448
    %v1712 = vunpack.c.l.b16 %v1449
    %v1713 = vunpack.c.l.b16 %v1450
    %v1714 = vunpack.c.l.b16 %v1451
    %v1715 = vunpack.c.l.b16 %v1452
    %v1716 = vunpack.c.l.b16 %v1453
    %v1717 = vunpack.c.l.b16 %v1454
    %v1718 = vunpack.c.l.b16 %v1455
    %v1719 = vunpack.c.l.b16 %v1456
    %v1720 = vunpack.c.l.b16 %v1457
    %v1721 = vunpack.c.l.b16 %v1458
    %v1722 = vunpack.c.l.b16 %v1459
    %v1723 = vunpack.c.l.b16 %v1460
    %v1724 = vunpack.c.l.b16 %v1461
    %v1725 = vunpack.c.l.b16 %v1462
    %v1726 = vunpack.c.l.b16 %v1463
    %v1727 = vunpack.c.l.b16 %v1464
    %v1728 = vunpack.c.l.b16 %v1465
    %v1729 = vunpack.c.l.b16 %v1466
    %v1730 = vunpack.c.l.b16 %v1467
    %v1731 = vunpack.c.l.b16 %v1468
    %v1732 = vunpack.c.l.b16 %v1469
    %v1733 = vunpack.c.l.b16 %v1470
    %v1734 = vunpack.c.l.b16 %v1471
    %v1735 = vunpack.c.l.b16 %v1472
    %v1736 = vunpack.c.l.b16 %v1473
    %v1737 = vunpack.c.l.b16 %v1474
    %v1738 = vunpack.c.l.b16 %v1475
    %v1739 = vunpack.c.l.b16 %v1476
    %v1740 = vunpack.c.l.b16 %v1477
    %v1741 = vunpack.c.l.b16 %v1478
    %v1742 = vunpack.c.l.b16 %v1479
    %v1743 = vunpack.c.l.b16 %v1480
    %v1744 = vunpack.c.l.b16 %v1481
    %v1745 = vunpack.c.l.b16 %v1482
    %v1746 = vunpack.c.l.b16 %v1483
    %v1747 = vunpack.c.l.b16 %v1484
    %v1748 = vunpack.c.l.b16 %v1485
    %v1749 = vunpack.c.l.b16 %v1486
    %v1750 = vunpack.c.l.b16 %v1487
    %v1751 = vunpack.c.l.b16 %v1488
    %v1752 = vunpack.c.l.b16 %v1489
    %v1753 = vunpack.c.l.b16 %v1490
    %v1754 = vunpack.c.l.b16 %v1491
    %v1755 = vunpack.c.l.b16 %v1492
    %v1756 = vunpack.c.l.b16 %v1493
    %v1757 = vunpack.c.l.b16 %v1494
    %v1758 = vunpack.c.l.b16 %v1495
    %v1759 = vunpack.c.l.b16 %v1496
    %v1760 = vunpack.c.l.b16 %v1497
    %v1761 = vunpack.c.l.b16 %v1498
    %v1762 = vunpack.c.l.b16 %v1499
    %v1763 = vunpack.c.l.b16 %v1500
    %v1764 = vunpack.c.l.b16 %v1501
    %v1765 = vunpack.c.l.b16 %v1502
    %v1766 = vunpack.c.l.b16 %v1503
    %v1767 = vunpack.c.l.b16 %v1504
    %v1768 = vunpack.c.l.b16 %v1505
    %v1769 = vunpack.c.l.b16 %v1506
    %v1770 = vunpack.c.l.b16 %v1507
    %v1771 = vunpack.c.l.b16 %v1508
    %v1772 = vunpack.c.l.b16 %v1509
    %v1773 = vunpack.c.l.b16 %v1510
    %v1774 = vunpack.c.l.b16 %v1511
    %v1775 = vunpack.c.l.b16 %v1512
    %v1776 = vunpack.c.l.b16 %v1513
    %v1777 = vunpack.c.l.b16 %v1514
    %v1778 = vunpack.c.l.b16 %v1515
    %v1779 = vunpack.c.l.b16 %v1516
    %v1780 = vunpack.c.l.b16 %v1517
    %v1781 = vunpack.c.l.b16 %v1518
    %v1782 = vunpack.c.l.b16 %v1519
    %v1783 = vunpack.c.l.b16 %v1520
    %v1784 = vunpack.c.l.b16 %v1521
    %v1785 = vunpack.c.l.b16 %v1522
    %v1786 = vunpack.c.l.b16 %v1523
    %v1787 = vunpack.c.l.b16 %v1524
    %v1788 = vunpack.c.l.b16 %v1525
    %v1789 = vunpack.c.l.b16 %v1526
    %v1790 = vunpack.c.l.b16 %v1527
    %v1791 = vunpack.c.l.b16 %v1528
    %v1792 = vunpack.c.l.b16 %v1529
    %v1793 = vunpack.c.l.b16 %v1530
    %v1794 = vunpack.c.l.b16 %v1531
    %v1795 = vunpack.c.l.b16 %v1532
    %v1796 = vunpack.c.l.b16 %v1533
    %v1797 = vunpack.c.l.b16 %v1534
    %v1798 = vunpack.c.l.b16 %v1535
    %v1799 = vunpack.c.l.b16 %v1536
    %v1800 = vunpack.c.l.b16 %v1537
    %v1801 = vunpack.c.l.b16 %v1538
    %v1802 = vunpack.c.l.b16 %v1539
    %v1803 = vunpack.c.l.b16 %v1540
    %v1804 = vunpack.c.l.b16 %v1541
    %v1805 = vunpack.c.l.b16 %v1542
    %v1806 = vunpack.c.l.b16 %v1543
    %v1807 = vunpack.c.l.b16 %v1544
    %v1808 = vunpack.c.l.b16 %v1545
    %v1809 = vunpack.c.l.b16 %v1546
    %v1810 = vunpack.c.l.b16 %v1547
    %v1811 = vunpack.c.l.b16 %v1548
    %v1812 = vunpack.c.l.b16 %v1549
    %v1813 = vunpack.c.l.b16 %v1550
    %v1814 = vunpack.c.l.b16 %v1551
    %v1815 = vunpack.c.l.b16 %v1552
    %v1816 = vunpack.c.l.b16 %v1553
    %v1817 = vunpack.c.l.b16 %v1554
    %v1818 = vunpack.c.l.b16 %v1555
    %v1819 = vunpack.c.l.b16 %v1556
    %v1820 = vunpack.c.l.b16 %v1557
    %v1821 = vunpack.c.l.b16 %v1558
    %v1822 = vpack.c.b16 %v1695, %v1694
    %v1823 = vpack.c.b16 %v1697, %v1696
    %v1824 = vpack.c.b16 %v1699, %v1698
    %v1825 = vpack.c.b16 %v1701, %v1700
    %v1826 = vpack.c.b16 %v1703, %v1702
    %v1827 = vpack.c.b16 %v1705, %v1704
    %v1828 = vpack.c.b16 %v1707, %v1706
    %v1829 = vpack.c.b16 %v1709, %v1708
    %v1830 = vpack.c.b16 %v1711, %v1710
    %v1831 = vpack.c.b16 %v1713, %v1712
    %v1832 = vpack.c.b16 %v1715, %v1714
    %v1833 = vpack.c.b16 %v1717, %v1716
    %v1834 = vpack.c.b16 %v1719, %v1718
    %v1835 = vpack.c.b16 %v1721, %v1720
    %v1836 = vpack.c.b16 %v1723, %v1722
    %v1837 = vpack.c.b16 %v1725, %v1724
    %v1838 = vpack.c.b16 %v1727, %v1726
    %v1839 = vpack.c.b16 %v1729, %v1728
    %v1840 = vpack.c.b16 %v1731, %v1730
    %v1841 = vpack.c.b16 %v1733, %v1732
    %v1842 = vpack.c.b16 %v1735, %v1734
    %v1843 = vpack.c.b16 %v1737, %v1736
    %v1844 = vpack.c.b16 %v1739, %v1738
    %v1845 = vpack.c.b16 %v1741, %v1740
    %v1846 = vpack.c.b16 %v1743, %v1742
    %v1847 = vpack.c.b16 %v1745, %v1744
    %v1848 = vpack.c.b16 %v1747, %v1746
    %v1849 = vpack.c.b16 %v1749, %v1748
    %v1850 = vpack.c.b16 %v1751, %v1750
    %v1851 = vpack.c.b16 %v1753, %v1752
    %v1852 = vpack.c.b16 %v1755, %v1754
    %v1853 = vpack.c.b16 %v1757, %v1756
    %v1854 = vpack.c.b16 %v1759, %v1758
    %v1855 = vpack.c.b16 %v1761, %v1760
    %v1856 = vpack.c.b16 %v1763, %v1762
    %v1857 = vpack.c.b16 %v1765, %v1764
    %v1858 = vpack.c.b16 %v1767, %v1766
    %v1859 = vpack.c.b16 %v1769, %v1768
    %v1860 = vpack.c.b16 %v1771, %v1770
    %v1861 = vpack.c.b16 %v1773, %v1772
    %v1862 = vpack.c.b16 %v1775, %v1774
    %v1863 = vpack.c.b16 %v1777, %v1776
    %v1864 = vpack.c.b16 %v1779, %v1778
    %v1865 = vpack.c.b16 %v1781, %v1780
    %v1866 = vpack.c.b16 %v1783, %v1782
    %v1867 = vpack.c.b16 %v1785, %v1784
    %v1868 = vpack.c.b16 %v1787, %v1786
    %v1869 = vpack.c.b16 %v1789, %v1788
    %v1870 = vpack.c.b16 %v1791, %v1790
    %v1871 = vpack.c.b16 %v1793, %v1792
    %v1872 = vpack.c.b16 %v1795, %v1794
    %v1873 = vpack.c.b16 %v1797, %v1796
    %v1874 = vpack.c.b16 %v1799, %v1798
    %v1875 = vpack.c.b16 %v1801, %v1800
    %v1876 = vpack.c.b16 %v1803, %v1802
    %v1877 = vpack.c.b16 %v1805, %v1804
    %v1878 = vpack.c.b16 %v1807, %v1806
    %v1879 = vpack.c.b16 %v1809, %v1808
    %v1880 = vpack.c.b16 %v1811, %v1810
    %v1881 = vpack.c.b16 %v1813, %v1812
    %v1882 = vpack.c.b16 %v1815, %v1814
    %v1883 = vpack.c.b16 %v1817, %v1816
    %v1884 = vpack.c.b16 %v1819, %v1818
    %v1885 = vpack.c.b16 %v1821, %v1820
    %1950 = vmatprep.subr.bf16.mxu0 0
    %1951 = vmatpush1.bf16.msra.mxu0 %v1822
    %1952 = vmatprep.subr.bf16.mxu0 0
    %1953 = vmatpush1.bf16.msra.mxu0 %v1823
    %1954 = vmatprep.subr.bf16.mxu0 0
    %1955 = vmatpush1.bf16.msra.mxu0 %v1824
    %1956 = vmatprep.subr.bf16.mxu0 0
    %1957 = vmatpush1.bf16.msra.mxu0 %v1825
    %1958 = vmatprep.subr.bf16.mxu0 0
    %1959 = vmatpush1.bf16.msra.mxu0 %v1826
    %1960 = vmatprep.subr.bf16.mxu0 0
    %1961 = vmatpush1.bf16.msra.mxu0 %v1827
    %1962 = vmatprep.subr.bf16.mxu0 0
    %1963 = vmatpush1.bf16.msra.mxu0 %v1828
    %1964 = vmatprep.subr.bf16.mxu0 0
    %1965 = vmatpush1.bf16.msra.mxu0 %v1829
    %1966 = vmatprep.subr.bf16.mxu0 0
    %1967 = vmatpush1.bf16.msra.mxu0 %v1830
    %1968 = vmatprep.subr.bf16.mxu0 0
    %1969 = vmatpush1.bf16.msra.mxu0 %v1831
    %1970 = vmatprep.subr.bf16.mxu0 0
    %1971 = vmatpush1.bf16.msra.mxu0 %v1832
    %1972 = vmatprep.subr.bf16.mxu0 0
    %1973 = vmatpush1.bf16.msra.mxu0 %v1833
    %1974 = vmatprep.subr.bf16.mxu0 0
    %1975 = vmatpush1.bf16.msra.mxu0 %v1834
    %1976 = vmatprep.subr.bf16.mxu0 0
    %1977 = vmatpush1.bf16.msra.mxu0 %v1835
    %1978 = vmatprep.subr.bf16.mxu0 0
    %1979 = vmatpush1.bf16.msra.mxu0 %v1836
    %1980 = vmatprep.subr.bf16.mxu0 0
    %1981 = vmatpush1.bf16.msra.mxu0 %v1837
    %1982 = vmatprep.mubr.bf16.mxu0 %v1424
    %1983 = vmatmul.mubr.bf16.gmra.mrb[0].mxu0 %v1423
    %v1984 = vpop.f32.mrb[0].mxu0
    %v1985 = vadd.f32 %v1564, %v1984
    %v1986 = vpop.f32.mrb[0].mxu0
    %v1987 = vpop.f32.mrb[0].mxu0
    %v1988 = vpop.f32.mrb[0].mxu0
    %1989 = vdwg.mxu0
    %1990 = vmatprep.subr.bf16.mxu0 0
    %1991 = vmatpush1.bf16.msra.mxu0 %v1838
    %1992 = vmatprep.subr.bf16.mxu0 0
    %1993 = vmatpush1.bf16.msra.mxu0 %v1839
    %1994 = vmatprep.subr.bf16.mxu0 0
    %1995 = vmatpush1.bf16.msra.mxu0 %v1840
    %1996 = vmatprep.subr.bf16.mxu0 0
    %1997 = vmatpush1.bf16.msra.mxu0 %v1841
    %1998 = vmatprep.subr.bf16.mxu0 0
    %1999 = vmatpush1.bf16.msra.mxu0 %v1842
    %2000 = vmatprep.subr.bf16.mxu0 0
    %2001 = vmatpush1.bf16.msra.mxu0 %v1843
    %2002 = vmatprep.subr.bf16.mxu0 0
    %2003 = vmatpush1.bf16.msra.mxu0 %v1844
    %2004 = vmatprep.subr.bf16.mxu0 0
    %2005 = vmatpush1.bf16.msra.mxu0 %v1845
    %2006 = vmatprep.subr.bf16.mxu0 0
    %2007 = vmatpush1.bf16.msra.mxu0 %v1846
    %2008 = vmatprep.subr.bf16.mxu0 0
    %2009 = vmatpush1.bf16.msra.mxu0 %v1847
    %2010 = vmatprep.subr.bf16.mxu0 0
    %2011 = vmatpush1.bf16.msra.mxu0 %v1848
    %2012 = vmatprep.subr.bf16.mxu0 0
    %2013 = vmatpush1.bf16.msra.mxu0 %v1849
    %2014 = vmatprep.subr.bf16.mxu0 0
    %2015 = vmatpush1.bf16.msra.mxu0 %v1850
    %2016 = vmatprep.subr.bf16.mxu0 0
    %2017 = vmatpush1.bf16.msra.mxu0 %v1851
    %2018 = vmatprep.subr.bf16.mxu0 0
    %2019 = vmatpush1.bf16.msra.mxu0 %v1852
    %2020 = vmatprep.subr.bf16.mxu0 0
    %2021 = vmatpush1.bf16.msra.mxu0 %v1853
    %2022 = vmatprep.mubr.bf16.mxu0 %v1426
    %2023 = vmatmul.mubr.bf16.gmra.mrb[0].mxu0 %v1425
    %v2024 = vpop.f32.mrb[0].mxu0
    %v2025 = vadd.f32 %v1985, %v2024
    %v2026 = vpop.f32.mrb[0].mxu0
    %v2027 = vpop.f32.mrb[0].mxu0
    %v2028 = vpop.f32.mrb[0].mxu0
    %2029 = vdwg.mxu0
    %2030 = vmatprep.subr.bf16.mxu0 0
    %2031 = vmatpush1.bf16.msra.mxu0 %v1854
    %2032 = vmatprep.subr.bf16.mxu0 0
    %2033 = vmatpush1.bf16.msra.mxu0 %v1855
    %2034 = vmatprep.subr.bf16.mxu0 0
    %2035 = vmatpush1.bf16.msra.mxu0 %v1856
    %2036 = vmatprep.subr.bf16.mxu0 0
    %2037 = vmatpush1.bf16.msra.mxu0 %v1857
    %2038 = vmatprep.subr.bf16.mxu0 0
    %2039 = vmatpush1.bf16.msra.mxu0 %v1858
    %2040 = vmatprep.subr.bf16.mxu0 0
    %2041 = vmatpush1.bf16.msra.mxu0 %v1859
    %2042 = vmatprep.subr.bf16.mxu0 0
    %2043 = vmatpush1.bf16.msra.mxu0 %v1860
    %2044 = vmatprep.subr.bf16.mxu0 0
    %2045 = vmatpush1.bf16.msra.mxu0 %v1861
    %2046 = vmatprep.subr.bf16.mxu0 0
    %2047 = vmatpush1.bf16.msra.mxu0 %v1862
    %2048 = vmatprep.subr.bf16.mxu0 0
    %2049 = vmatpush1.bf16.msra.mxu0 %v1863
    %2050 = vmatprep.subr.bf16.mxu0 0
    %2051 = vmatpush1.bf16.msra.mxu0 %v1864
    %2052 = vmatprep.subr.bf16.mxu0 0
    %2053 = vmatpush1.bf16.msra.mxu0 %v1865
    %2054 = vmatprep.subr.bf16.mxu0 0
    %2055 = vmatpush1.bf16.msra.mxu0 %v1866
    %2056 = vmatprep.subr.bf16.mxu0 0
    %2057 = vmatpush1.bf16.msra.mxu0 %v1867
    %2058 = vmatprep.subr.bf16.mxu0 0
    %2059 = vmatpush1.bf16.msra.mxu0 %v1868
    %2060 = vmatprep.subr.bf16.mxu0 0
    %2061 = vmatpush1.bf16.msra.mxu0 %v1869
    %2062 = vmatprep.mubr.bf16.mxu0 %v1428
    %2063 = vmatmul.mubr.bf16.gmra.mrb[0].mxu0 %v1427
    %v2064 = vpop.f32.mrb[0].mxu0
    %v2065 = vadd.f32 %v2025, %v2064
    %v2066 = vpop.f32.mrb[0].mxu0
    %v2067 = vpop.f32.mrb[0].mxu0
    %v2068 = vpop.f32.mrb[0].mxu0
    %2069 = vdwg.mxu0
    %2070 = vmatprep.subr.bf16.mxu0 0
    %2071 = vmatpush1.bf16.msra.mxu0 %v1870
    %2072 = vmatprep.subr.bf16.mxu0 0
    %2073 = vmatpush1.bf16.msra.mxu0 %v1871
    %2074 = vmatprep.subr.bf16.mxu0 0
    %2075 = vmatpush1.bf16.msra.mxu0 %v1872
    %2076 = vmatprep.subr.bf16.mxu0 0
    %2077 = vmatpush1.bf16.msra.mxu0 %v1873
    %2078 = vmatprep.subr.bf16.mxu0 0
    %2079 = vmatpush1.bf16.msra.mxu0 %v1874
    %2080 = vmatprep.subr.bf16.mxu0 0
    %2081 = vmatpush1.bf16.msra.mxu0 %v1875
    %2082 = vmatprep.subr.bf16.mxu0 0
    %2083 = vmatpush1.bf16.msra.mxu0 %v1876
    %2084 = vmatprep.subr.bf16.mxu0 0
    %2085 = vmatpush1.bf16.msra.mxu0 %v1877
    %2086 = vmatprep.subr.bf16.mxu0 0
    %2087 = vmatpush1.bf16.msra.mxu0 %v1878
    %2088 = vmatprep.subr.bf16.mxu0 0
    %2089 = vmatpush1.bf16.msra.mxu0 %v1879
    %2090 = vmatprep.subr.bf16.mxu0 0
    %2091 = vmatpush1.bf16.msra.mxu0 %v1880
    %2092 = vmatprep.subr.bf16.mxu0 0
    %2093 = vmatpush1.bf16.msra.mxu0 %v1881
    %2094 = vmatprep.subr.bf16.mxu0 0
    %2095 = vmatpush1.bf16.msra.mxu0 %v1882
    %2096 = vmatprep.subr.bf16.mxu0 0
    %2097 = vmatpush1.bf16.msra.mxu0 %v1883
    %2098 = vmatprep.subr.bf16.mxu0 0
    %2099 = vmatpush1.bf16.msra.mxu0 %v1884
    %2100 = vmatprep.subr.bf16.mxu0 0
    %2101 = vmatpush1.bf16.msra.mxu0 %v1885
    %2102 = vmatprep.mubr.bf16.mxu0 %v1430
    %2103 = vmatmul.mubr.bf16.gmra.mrb[0].mxu0 %v1429
    %v2104 = vpop.f32.mrb[0].mxu0
    %v2105 = vadd.f32 %v2065, %v2104
    %v2106 = vpop.f32.mrb[0].mxu0
    %v2107 = vpop.f32.mrb[0].mxu0
    %v2108 = vpop.f32.mrb[0].mxu0
    %2109 = vdwg.mxu0
    %vm2110 = vcmp.gt.f32.partialorder %v2105, 0.0
    %v2111 = vmul.f32 %v2105, 0.1
    %v2112 = vsel %vm2110, %v2105, %v2111
    %v2113 = vpack.c.bf16 %v2112, %v2112
    %v2114 = vld [vmem:[%s1] sm:$0xff]
    %v2115 = vpack.c.bf16 %v2114, %v2114
    %v2116 = vld [vmem:[%s6] sm:$0xf]
    %v2117 = vld [vmem:[%s6 + $0x4] sm:$0x3]
    %v2118 = vld [vmem:[%s7] sm:$0x1]
    %v2120 = vlaneseq
    %v2121 = vshrl.u32 %v2120, 7
    %v2122 = vsub.s32 0, %v2121
    %v2123 = vrot.slane %v2118, %v2122
    %v2127 = vunpack.c.l.b16 %v2116
    %v2128 = vunpack.c.l.b16 %v2117
    %v2129 = vpack.c.b16 %v2128, %v2127
    %vm2130 = vcmask 97280
    %v2132 = vsel %vm2130, %v2115, 0
    %v2135 = vsel %vm1046, %v2129, 0
    %2137 = vmatprep.subr.bf16.mxu0 0
    %2138 = vmatpush1.bf16.msra.mxu0 %v2135
    %2139 = vmatprep.subr.bf16.mxu0 0
    %2140 = vmatpush1.bf16.msra.mxu0 0
    %2141 = vmatprep.subr.bf16.mxu0 0
    %2142 = vmatpush1.bf16.msra.mxu0 0
    %2143 = vmatprep.subr.bf16.mxu0 0
    %2144 = vmatpush1.bf16.msra.mxu0 0
    %2145 = vmatprep.subr.bf16.mxu0 0
    %2146 = vmatpush1.bf16.msra.mxu0 0
    %2147 = vmatprep.subr.bf16.mxu0 0
    %2148 = vmatpush1.bf16.msra.mxu0 0
    %2149 = vmatprep.subr.bf16.mxu0 0
    %2150 = vmatpush1.bf16.msra.mxu0 0
    %2151 = vmatprep.subr.bf16.mxu0 0
    %2152 = vmatpush1.bf16.msra.mxu0 0
    %2153 = vmatprep.subr.bf16.mxu0 0
    %2154 = vmatpush1.bf16.msra.mxu0 0
    %2155 = vmatprep.subr.bf16.mxu0 0
    %2156 = vmatpush1.bf16.msra.mxu0 0
    %2157 = vmatprep.subr.bf16.mxu0 0
    %2158 = vmatpush1.bf16.msra.mxu0 0
    %2159 = vmatprep.subr.bf16.mxu0 0
    %2160 = vmatpush1.bf16.msra.mxu0 0
    %2161 = vmatprep.subr.bf16.mxu0 0
    %2162 = vmatpush1.bf16.msra.mxu0 0
    %2163 = vmatprep.subr.bf16.mxu0 0
    %2164 = vmatpush1.bf16.msra.mxu0 0
    %2165 = vmatprep.subr.bf16.mxu0 0
    %2166 = vmatpush1.bf16.msra.mxu0 0
    %2167 = vmatprep.subr.bf16.mxu0 0
    %2168 = vmatpush1.bf16.msra.mxu0 0
    %2169 = vmatprep.mubr.bf16.mxu0 0
    %2170 = vmatmul.mubr.bf16.gmra.mrb[0].mxu0 %v2132
    %v2171 = vpop.f32.mrb[0].mxu0
    %v2172 = vadd.f32 %v2123, %v2171
    %v2173 = vpop.f32.mrb[0].mxu0
    %v2174 = vpop.f32.mrb[0].mxu0
    %v2175 = vpop.f32.mrb[0].mxu0
    %2176 = vdwg.mxu0
    %vm2177 = vcmp.gt.f32.partialorder %v2172, 0.0
    %v2178 = vmul.f32 %v2172, 0.1
    %v2179 = vsel %vm2177, %v2172, %v2178
    %v2180 = vpack.c.bf16 %v2179, %v2179
    %v2181 = vld [vmem:[%s8] sm:$0xf]
    %v2182 = vld [vmem:[%s8 + $0x4] sm:$0xf]
    %v2183 = vld [vmem:[%s8 + $0x8] sm:$0xf]
    %v2184 = vld [vmem:[%s8 + $0xc] sm:$0x7]
    %v2185 = vld [vmem:[%s9] sm:$0x1]
    %v2187 = vlaneseq
    %v2188 = vshrl.u32 %v2187, 7
    %v2189 = vsub.s32 0, %v2188
    %v2190 = vrot.slane %v2185, %v2189
    %v2196 = vunpack.c.l.b16 %v2181
    %v2197 = vunpack.c.l.b16 %v2182
    %v2198 = vunpack.c.l.b16 %v2183
    %v2199 = vunpack.c.l.b16 %v2184
    %v2200 = vpack.c.b16 %v2197, %v2196
    %v2201 = vpack.c.b16 %v2199, %v2198
    %vm2203 = vcmask 244736
    %v2205 = vsel %vm2203, %v2180, 0
    %vm2207 = vcmask 1046528
    %v2209 = vsel %vm2207, %v2201, 0
    %2211 = vmatprep.subr.bf16.mxu0 0
    %2212 = vmatpush1.bf16.msra.mxu0 %v2200
    %2213 = vmatprep.subr.bf16.mxu0 0
    %2214 = vmatpush1.bf16.msra.mxu0 %v2209
    %2215 = vmatprep.subr.bf16.mxu0 0
    %2216 = vmatpush1.bf16.msra.mxu0 0
    %2217 = vmatprep.subr.bf16.mxu0 0
    %2218 = vmatpush1.bf16.msra.mxu0 0
    %2219 = vmatprep.subr.bf16.mxu0 0
    %2220 = vmatpush1.bf16.msra.mxu0 0
    %2221 = vmatprep.subr.bf16.mxu0 0
    %2222 = vmatpush1.bf16.msra.mxu0 0
    %2223 = vmatprep.subr.bf16.mxu0 0
    %2224 = vmatpush1.bf16.msra.mxu0 0
    %2225 = vmatprep.subr.bf16.mxu0 0
    %2226 = vmatpush1.bf16.msra.mxu0 0
    %2227 = vmatprep.subr.bf16.mxu0 0
    %2228 = vmatpush1.bf16.msra.mxu0 0
    %2229 = vmatprep.subr.bf16.mxu0 0
    %2230 = vmatpush1.bf16.msra.mxu0 0
    %2231 = vmatprep.subr.bf16.mxu0 0
    %2232 = vmatpush1.bf16.msra.mxu0 0
    %2233 = vmatprep.subr.bf16.mxu0 0
    %2234 = vmatpush1.bf16.msra.mxu0 0
    %2235 = vmatprep.subr.bf16.mxu0 0
    %2236 = vmatpush1.bf16.msra.mxu0 0
    %2237 = vmatprep.subr.bf16.mxu0 0
    %2238 = vmatpush1.bf16.msra.mxu0 0
    %2239 = vmatprep.subr.bf16.mxu0 0
    %2240 = vmatpush1.bf16.msra.mxu0 0
    %2241 = vmatprep.subr.bf16.mxu0 0
    %2242 = vmatpush1.bf16.msra.mxu0 0
    %2243 = vmatprep.mubr.bf16.mxu0 0
    %2244 = vmatmul.mubr.bf16.gmra.mrb[0].mxu0 %v2205
    %v2245 = vpop.f32.mrb[0].mxu0
    %v2246 = vadd.f32 %v2190, %v2245
    %v2247 = vpop.f32.mrb[0].mxu0
    %v2248 = vpop.f32.mrb[0].mxu0
    %v2249 = vpop.f32.mrb[0].mxu0
    %2250 = vdwg.mxu0
    %vm2251 = vcmp.gt.f32.partialorder %v2246, 0.0
    %v2252 = vmul.f32 %v2246, 0.1
    %v2253 = vsel %vm2251, %v2246, %v2252
    %v2254 = vpack.c.bf16 %v2253, %v2253
    %2255 = vst [vmem:[#allocation2] sm:$0xf] %v2113
    %2256 = vst [vmem:[#allocation2 + $0x4] sm:$0xf] %v2254
    %v2257 = vld [vmem:[#allocation2] sm:$0xff]
    %v2258 = vld [vmem:[%s10] sm:$0xf]
    %v2259 = vld [vmem:[%s10 + $0x4] sm:$0xf]
    %v2260 = vld [vmem:[%s10 + $0x8] sm:$0xf]
    %v2261 = vld [vmem:[%s10 + $0xc] sm:$0xf]
    %v2262 = vld [vmem:[%s10 + $0x10] sm:$0xf]
    %v2263 = vld [vmem:[%s10 + $0x14] sm:$0xf]
    %v2264 = vld [vmem:[%s10 + $0x18] sm:$0xf]
    %v2265 = vld [vmem:[%s10 + $0x1c] sm:$0xf]
    %v2266 = vld [vmem:[%s10 + $0x20] sm:$0xf]
    %v2267 = vld [vmem:[%s10 + $0x24] sm:$0xf]
    %v2268 = vld [vmem:[%s10 + $0x28] sm:$0xf]
    %v2269 = vld [vmem:[%s10 + $0x2c] sm:$0xf]
    %v2270 = vld [vmem:[%s10 + $0x30] sm:$0xf]
    %v2271 = vld [vmem:[%s10 + $0x34] sm:$0xf]
    %v2272 = vld [vmem:[%s10 + $0x38] sm:$0xf]
    %v2273 = vld [vmem:[%s10 + $0x3c] sm:$0xf]
    %v2274 = vld [vmem:[%s10 + $0x40] sm:$0xf]
    %v2275 = vld [vmem:[%s10 + $0x44] sm:$0xf]
    %v2276 = vld [vmem:[%s10 + $0x48] sm:$0xf]
    %v2277 = vld [vmem:[%s10 + $0x4c] sm:$0xf]
    %v2278 = vld [vmem:[%s10 + $0x50] sm:$0xf]
    %v2279 = vld [vmem:[%s10 + $0x54] sm:$0xf]
    %v2280 = vld [vmem:[%s10 + $0x58] sm:$0xf]
    %v2281 = vld [vmem:[%s10 + $0x5c] sm:$0xf]
    %v2282 = vld [vmem:[%s10 + $0x60] sm:$0xf]
    %v2283 = vld [vmem:[%s10 + $0x64] sm:$0xf]
    %v2284 = vld [vmem:[%s10 + $0x68] sm:$0xf]
    %v2285 = vld [vmem:[%s10 + $0x6c] sm:$0xf]
    %v2286 = vld [vmem:[%s10 + $0x70] sm:$0xf]
    %v2287 = vld [vmem:[%s10 + $0x74] sm:$0xf]
    %v2288 = vld [vmem:[%s10 + $0x78] sm:$0xf]
    %v2289 = vld [vmem:[%s10 + $0x7c] sm:$0xf]
    %v2290 = vld [vmem:[%s11] sm:$0x1]
    %v2292 = vlaneseq
    %v2293 = vshrl.u32 %v2292, 7
    %v2294 = vsub.s32 0, %v2293
    %v2295 = vrot.slane %v2290, %v2294
    %v2298 = vunpack.c.l.b16 %v2257
    %v2299 = vunpack.c.h.b16 %v2257
    %v2300 = vpack.c.b16 %v2298, %v2298
    %v2301 = vpack.c.b16 %v2299, %v2299
    %v2336 = vunpack.c.l.b16 %v2258
    %v2337 = vunpack.c.l.b16 %v2259
    %v2338 = vunpack.c.l.b16 %v2260
    %v2339 = vunpack.c.l.b16 %v2261
    %v2340 = vunpack.c.l.b16 %v2262
    %v2341 = vunpack.c.l.b16 %v2263
    %v2342 = vunpack.c.l.b16 %v2264
    %v2343 = vunpack.c.l.b16 %v2265
    %v2344 = vunpack.c.l.b16 %v2266
    %v2345 = vunpack.c.l.b16 %v2267
    %v2346 = vunpack.c.l.b16 %v2268
    %v2347 = vunpack.c.l.b16 %v2269
    %v2348 = vunpack.c.l.b16 %v2270
    %v2349 = vunpack.c.l.b16 %v2271
    %v2350 = vunpack.c.l.b16 %v2272
    %v2351 = vunpack.c.l.b16 %v2273
    %v2352 = vunpack.c.l.b16 %v2274
    %v2353 = vunpack.c.l.b16 %v2275
    %v2354 = vunpack.c.l.b16 %v2276
    %v2355 = vunpack.c.l.b16 %v2277
    %v2356 = vunpack.c.l.b16 %v2278
    %v2357 = vunpack.c.l.b16 %v2279
    %v2358 = vunpack.c.l.b16 %v2280
    %v2359 = vunpack.c.l.b16 %v2281
    %v2360 = vunpack.c.l.b16 %v2282
    %v2361 = vunpack.c.l.b16 %v2283
    %v2362 = vunpack.c.l.b16 %v2284
    %v2363 = vunpack.c.l.b16 %v2285
    %v2364 = vunpack.c.l.b16 %v2286
    %v2365 = vunpack.c.l.b16 %v2287
    %v2366 = vunpack.c.l.b16 %v2288
    %v2367 = vunpack.c.l.b16 %v2289
    %v2368 = vpack.c.b16 %v2337, %v2336
    %v2369 = vpack.c.b16 %v2339, %v2338
    %v2370 = vpack.c.b16 %v2341, %v2340
    %v2371 = vpack.c.b16 %v2343, %v2342
    %v2372 = vpack.c.b16 %v2345, %v2344
    %v2373 = vpack.c.b16 %v2347, %v2346
    %v2374 = vpack.c.b16 %v2349, %v2348
    %v2375 = vpack.c.b16 %v2351, %v2350
    %v2376 = vpack.c.b16 %v2353, %v2352
    %v2377 = vpack.c.b16 %v2355, %v2354
    %v2378 = vpack.c.b16 %v2357, %v2356
    %v2379 = vpack.c.b16 %v2359, %v2358
    %v2380 = vpack.c.b16 %v2361, %v2360
    %v2381 = vpack.c.b16 %v2363, %v2362
    %v2382 = vpack.c.b16 %v2365, %v2364
    %v2383 = vpack.c.b16 %v2367, %v2366
    %2400 = vmatprep.subr.bf16.mxu0 0
    %2401 = vmatpush1.bf16.msra.mxu0 %v2368
    %2402 = vmatprep.subr.bf16.mxu0 0
    %2403 = vmatpush1.bf16.msra.mxu0 %v2369
    %2404 = vmatprep.subr.bf16.mxu0 0
    %2405 = vmatpush1.bf16.msra.mxu0 %v2370
    %2406 = vmatprep.subr.bf16.mxu0 0
    %2407 = vmatpush1.bf16.msra.mxu0 %v2371
    %2408 = vmatprep.subr.bf16.mxu0 0
    %2409 = vmatpush1.bf16.msra.mxu0 %v2372
    %2410 = vmatprep.subr.bf16.mxu0 0
    %2411 = vmatpush1.bf16.msra.mxu0 %v2373
    %2412 = vmatprep.subr.bf16.mxu0 0
    %2413 = vmatpush1.bf16.msra.mxu0 %v2374
    %2414 = vmatprep.subr.bf16.mxu0 0
    %2415 = vmatpush1.bf16.msra.mxu0 %v2375
    %2416 = vmatprep.subr.bf16.mxu0 0
    %2417 = vmatpush1.bf16.msra.mxu0 %v2376
    %2418 = vmatprep.subr.bf16.mxu0 0
    %2419 = vmatpush1.bf16.msra.mxu0 %v2377
    %2420 = vmatprep.subr.bf16.mxu0 0
    %2421 = vmatpush1.bf16.msra.mxu0 %v2378
    %2422 = vmatprep.subr.bf16.mxu0 0
    %2423 = vmatpush1.bf16.msra.mxu0 %v2379
    %2424 = vmatprep.subr.bf16.mxu0 0
    %2425 = vmatpush1.bf16.msra.mxu0 %v2380
    %2426 = vmatprep.subr.bf16.mxu0 0
    %2427 = vmatpush1.bf16.msra.mxu0 %v2381
    %2428 = vmatprep.subr.bf16.mxu0 0
    %2429 = vmatpush1.bf16.msra.mxu0 %v2382
    %2430 = vmatprep.subr.bf16.mxu0 0
    %2431 = vmatpush1.bf16.msra.mxu0 %v2383
    %2432 = vmatprep.mubr.bf16.mxu0 %v2301
    %2433 = vmatmul.mubr.bf16.gmra.mrb[0].mxu0 %v2300
    %v2434 = vpop.f32.mrb[0].mxu0
    %v2435 = vadd.f32 %v2295, %v2434
    %v2436 = vpop.f32.mrb[0].mxu0
    %v2437 = vpop.f32.mrb[0].mxu0
    %v2438 = vpop.f32.mrb[0].mxu0
    %2439 = vdwg.mxu0
    %vm2440 = vcmp.gt.f32.partialorder %v2435, 0.0
    %v2441 = vmul.f32 %v2435, 0.1
    %v2442 = vsel %vm2440, %v2435, %v2441
    %v2443 = vpack.c.bf16 %v2442, %v2442
    %v2444 = vld [vmem:[%s12] sm:$0xf]
    %v2445 = vld [vmem:[%s12 + $0x4] sm:$0xf]
    %v2446 = vld [vmem:[%s12 + $0x8] sm:$0xf]
    %v2447 = vld [vmem:[%s12 + $0xc] sm:$0x7]
    %v2448 = vld [vmem:[%s13] sm:$0x1]
    %v2450 = vlaneseq
    %v2451 = vshrl.u32 %v2450, 7
    %v2452 = vsub.s32 0, %v2451
    %v2453 = vrot.slane %v2448, %v2452
    %v2459 = vunpack.c.l.b16 %v2444
    %v2460 = vunpack.c.l.b16 %v2445
    %v2461 = vunpack.c.l.b16 %v2446
    %v2462 = vunpack.c.l.b16 %v2447
    %v2463 = vpack.c.b16 %v2460, %v2459
    %v2464 = vpack.c.b16 %v2462, %v2461
    %v2467 = vsel %vm2203, %v2443, 0
    %v2470 = vsel %vm2207, %v2464, 0
    %2472 = vmatprep.subr.bf16.mxu0 0
    %2473 = vmatpush1.bf16.msra.mxu0 %v2463
    %2474 = vmatprep.subr.bf16.mxu0 0
    %2475 = vmatpush1.bf16.msra.mxu0 %v2470
    %2476 = vmatprep.subr.bf16.mxu0 0
    %2477 = vmatpush1.bf16.msra.mxu0 0
    %2478 = vmatprep.subr.bf16.mxu0 0
    %2479 = vmatpush1.bf16.msra.mxu0 0
    %2480 = vmatprep.subr.bf16.mxu0 0
    %2481 = vmatpush1.bf16.msra.mxu0 0
    %2482 = vmatprep.subr.bf16.mxu0 0
    %2483 = vmatpush1.bf16.msra.mxu0 0
    %2484 = vmatprep.subr.bf16.mxu0 0
    %2485 = vmatpush1.bf16.msra.mxu0 0
    %2486 = vmatprep.subr.bf16.mxu0 0
    %2487 = vmatpush1.bf16.msra.mxu0 0
    %2488 = vmatprep.subr.bf16.mxu0 0
    %2489 = vmatpush1.bf16.msra.mxu0 0
    %2490 = vmatprep.subr.bf16.mxu0 0
    %2491 = vmatpush1.bf16.msra.mxu0 0
    %2492 = vmatprep.subr.bf16.mxu0 0
    %2493 = vmatpush1.bf16.msra.mxu0 0
    %2494 = vmatprep.subr.bf16.mxu0 0
    %2495 = vmatpush1.bf16.msra.mxu0 0
    %2496 = vmatprep.subr.bf16.mxu0 0
    %2497 = vmatpush1.bf16.msra.mxu0 0
    %2498 = vmatprep.subr.bf16.mxu0 0
    %2499 = vmatpush1.bf16.msra.mxu0 0
    %2500 = vmatprep.subr.bf16.mxu0 0
    %2501 = vmatpush1.bf16.msra.mxu0 0
    %2502 = vmatprep.subr.bf16.mxu0 0
    %2503 = vmatpush1.bf16.msra.mxu0 0
    %2504 = vmatprep.mubr.bf16.mxu0 0
    %2505 = vmatmul.mubr.bf16.gmra.mrb[0].mxu0 %v2467
    %v2506 = vpop.f32.mrb[0].mxu0
    %v2507 = vadd.f32 %v2453, %v2506
    %v2508 = vpop.f32.mrb[0].mxu0
    %v2509 = vpop.f32.mrb[0].mxu0
    %v2510 = vpop.f32.mrb[0].mxu0
    %2511 = vdwg.mxu0
    %vm2512 = vcmp.gt.f32.partialorder %v2507, 0.0
    %v2513 = vmul.f32 %v2507, 0.1
    %v2514 = vsel %vm2512, %v2507, %v2513
    %v2515 = vpack.c.bf16 %v2514, %v2514
    %v2516 = vld [vmem:[%s14] sm:$0xf]
    %v2517 = vld [vmem:[%s14 + $0x4] sm:$0xf]
    %v2518 = vld [vmem:[%s14 + $0x8] sm:$0xf]
    %v2519 = vld [vmem:[%s14 + $0xc] sm:$0xf]
    %v2520 = vld [vmem:[%s14 + $0x10] sm:$0xf]
    %v2521 = vld [vmem:[%s14 + $0x14] sm:$0xf]
    %v2522 = vld [vmem:[%s14 + $0x18] sm:$0xf]
    %v2523 = vld [vmem:[%s14 + $0x1c] sm:$0xf]
    %v2524 = vld [vmem:[%s14 + $0x20] sm:$0xf]
    %v2525 = vld [vmem:[%s14 + $0x24] sm:$0xf]
    %v2526 = vld [vmem:[%s14 + $0x28] sm:$0xf]
    %v2527 = vld [vmem:[%s14 + $0x2c] sm:$0xf]
    %v2528 = vld [vmem:[%s14 + $0x30] sm:$0xf]
    %v2529 = vld [vmem:[%s14 + $0x34] sm:$0xf]
    %v2530 = vld [vmem:[%s14 + $0x38] sm:$0xf]
    %v2531 = vld [vmem:[%s14 + $0x3c] sm:$0xf]
    %v2532 = vld [vmem:[%s15] sm:$0x1]
    %v2534 = vlaneseq
    %v2535 = vshrl.u32 %v2534, 7
    %v2536 = vsub.s32 0, %v2535
    %v2537 = vrot.slane %v2532, %v2536
    %v2555 = vunpack.c.l.b16 %v2516
    %v2556 = vunpack.c.l.b16 %v2517
    %v2557 = vunpack.c.l.b16 %v2518
    %v2558 = vunpack.c.l.b16 %v2519
    %v2559 = vunpack.c.l.b16 %v2520
    %v2560 = vunpack.c.l.b16 %v2521
    %v2561 = vunpack.c.l.b16 %v2522
    %v2562 = vunpack.c.l.b16 %v2523
    %v2563 = vunpack.c.l.b16 %v2524
    %v2564 = vunpack.c.l.b16 %v2525
    %v2565 = vunpack.c.l.b16 %v2526
    %v2566 = vunpack.c.l.b16 %v2527
    %v2567 = vunpack.c.l.b16 %v2528
    %v2568 = vunpack.c.l.b16 %v2529
    %v2569 = vunpack.c.l.b16 %v2530
    %v2570 = vunpack.c.l.b16 %v2531
    %v2571 = vpack.c.b16 %v2556, %v2555
    %v2572 = vpack.c.b16 %v2558, %v2557
    %v2573 = vpack.c.b16 %v2560, %v2559
    %v2574 = vpack.c.b16 %v2562, %v2561
    %v2575 = vpack.c.b16 %v2564, %v2563
    %v2576 = vpack.c.b16 %v2566, %v2565
    %v2577 = vpack.c.b16 %v2568, %v2567
    %v2578 = vpack.c.b16 %v2570, %v2569
    %2587 = vmatprep.subr.bf16.mxu0 0
    %2588 = vmatpush1.bf16.msra.mxu0 %v2571
    %2589 = vmatprep.subr.bf16.mxu0 0
    %2590 = vmatpush1.bf16.msra.mxu0 %v2572
    %2591 = vmatprep.subr.bf16.mxu0 0
    %2592 = vmatpush1.bf16.msra.mxu0 %v2573
    %2593 = vmatprep.subr.bf16.mxu0 0
    %2594 = vmatpush1.bf16.msra.mxu0 %v2574
    %2595 = vmatprep.subr.bf16.mxu0 0
    %2596 = vmatpush1.bf16.msra.mxu0 %v2575
    %2597 = vmatprep.subr.bf16.mxu0 0
    %2598 = vmatpush1.bf16.msra.mxu0 %v2576
    %2599 = vmatprep.subr.bf16.mxu0 0
    %2600 = vmatpush1.bf16.msra.mxu0 %v2577
    %2601 = vmatprep.subr.bf16.mxu0 0
    %2602 = vmatpush1.bf16.msra.mxu0 %v2578
    %2603 = vmatprep.subr.bf16.mxu0 0
    %2604 = vmatpush1.bf16.msra.mxu0 0
    %2605 = vmatprep.subr.bf16.mxu0 0
    %2606 = vmatpush1.bf16.msra.mxu0 0
    %2607 = vmatprep.subr.bf16.mxu0 0
    %2608 = vmatpush1.bf16.msra.mxu0 0
    %2609 = vmatprep.subr.bf16.mxu0 0
    %2610 = vmatpush1.bf16.msra.mxu0 0
    %2611 = vmatprep.subr.bf16.mxu0 0
    %2612 = vmatpush1.bf16.msra.mxu0 0
    %2613 = vmatprep.subr.bf16.mxu0 0
    %2614 = vmatpush1.bf16.msra.mxu0 0
    %2615 = vmatprep.subr.bf16.mxu0 0
    %2616 = vmatpush1.bf16.msra.mxu0 0
    %2617 = vmatprep.subr.bf16.mxu0 0
    %2618 = vmatpush1.bf16.msra.mxu0 0
    %2619 = vmatprep.mubr.bf16.mxu0 0
    %2620 = vmatmul.mubr.bf16.gmra.mrb[0].mxu0 %v2515
    %v2621 = vpop.f32.mrb[0].mxu0
    %v2622 = vadd.f32 %v2537, %v2621
    %v2623 = vpop.f32.mrb[0].mxu0
    %v2624 = vpop.f32.mrb[0].mxu0
    %v2625 = vpop.f32.mrb[0].mxu0
    %2626 = vdwg.mxu0
    %vm2627 = vcmp.gt.f32.partialorder %v2622, 0.0
    %v2628 = vmul.f32 %v2622, 0.1
    %v2629 = vsel %vm2627, %v2622, %v2628
    %v2630 = vld [vmem:[%s16] sm:$0x1]
    %v2632 = vlaneseq
    %v2633 = vshrl.u32 %v2632, 7
    %v2634 = vsub.s32 0, %v2633
    %v2635 = vrot.slane %v2630, %v2634
    %v2637 = vmul.f32 %v2629, %v2635
    %vm2638 = vcmask 80896
    %v2639 = vsel %vm2638, %v2637, 0.0
    %2640 = vadd.xlane.f32.xlu0 %v2639
    %v2641 = vpop.xlane.xlu0 %2640
    %v2642 = vld [vmem:[#allocation3] sm:$0x1]
    %v2644 = vlaneseq
    %v2645 = vshrl.u32 %v2644, 7
    %v2646 = vsub.s32 0, %v2645
    %v2647 = vrot.slane %v2642, %v2646
    %v2649 = vadd.f32 %v2641, %v2647
    %vm2650 = vcmask 7168
    %2651 = vst.msk [vmem:[%s18] sm:$0xff] %vm2650, %v2649
    // Predicated region
    $region82: #{_sparse_nn_call.1} parent=1 // pred_check
      _
    $region83: #{_sparse_nn_call.1} parent=1 // pred_check_branch
      %2653 = sbr.rel (0) target = $region85
    $region84: #{_sparse_nn_call.1} parent=1 // pred_region
      _
    $region85: #{_sparse_nn_call.1} parent=1 // pred_fallthru
      _
    // Predicated region
    $region86: #{_sparse_nn_call.1} parent=1 // pred_check
      _
    $region87: #{_sparse_nn_call.1} parent=1 // pred_check_branch
      %2655 = sbr.rel (0) target = $region89
    $region88: #{_sparse_nn_call.1} parent=1 // pred_region
      _
    $region89: #{_sparse_nn_call.1} parent=1 // pred_fallthru
      _
    %2656 = vsyncpa [#allocation5], 1
    %2657 = vsyncpa [#allocation7], 1

</llo_original>
